<compile_context>
chip_gen: v5e
topology: v5e:2x2
jax: 0.10.0
libtpu: 0.0.40
codegen_flags: <defaults>
</compile_context>

<pallas_src>
import math

import numpy as np
import jax
import jax.numpy as jnp
from jax.experimental import pallas as pl
from jax.experimental.pallas import tpu as pltpu

_MAX_LANES = 2048          # widest flattened slab we are willing to tile
_BLOCK_BYTES = 1 << 20     # ~1 MiB (f32) per array per block -> ~8 MiB double-buffered


# ----------------------------------------------------------------------------- kernel math
def _focal_terms(x, t, gamma, alpha):
    """Unweighted focal loss (all f32). One shared exp(-|x|) feeds sigmoid + stable BCE."""
    e = jnp.exp(-jnp.abs(x))
    inv = 1.0 / (1.0 + e)                              # sigmoid(|x|); exact divide (mem-bound)
    pred_sigmoid = jnp.where(x >= 0.0, inv, e * inv)   # sigmoid(x) without cancellation
    alpha_weight = (1.0 - alpha) + t * (2.0 * alpha - 1.0)
    pt = pred_sigmoid + t * (1.0 - 2.0 * pred_sigmoid)
    g = float(gamma)
    if g.is_integer():
        gi = int(g)
        pt_pow = pt * pt if gi == 2 else pt ** gi      # integer_pow -> pure VPU multiplies
    else:
        pt_pow = pt ** jnp.float32(g)                  # general exponent (EUP exp/log)
    # tf.nn.sigmoid_cross_entropy_with_logits: max(x,0) - x*t + log1p(exp(-|x|))
    bce = jnp.maximum(x, 0.0) - x * t + jnp.log1p(e)
    return alpha_weight * pt_pow * bce


def _make_anchor_weight_kernel(gamma, alpha, num_classes, G, lanes):
    """x/t/out blocks are (rows, lanes); w block is (rows, G) per-anchor weights that are
    expanded along the class axis in-kernel via a 0/1 selection matmul on the idle MXU."""
    gamma = float(gamma)
    alpha = float(alpha)

    def kernel(x_ref, t_ref, w_ref, o_ref):
        x = x_ref[...].astype(jnp.float32)
        t = t_ref[...].astype(jnp.float32)
        w = w_ref[...].astype(jnp.float32)
        loss = _focal_terms(x, t, gamma, alpha)
        # Selection matrix E[g, l] = 1 iff lane l belongs to anchor slot g (l // C == g).
        g_idx = jax.lax.broadcasted_iota(jnp.int32, (G, lanes), 0)
        l_idx = jax.lax.broadcasted_iota(jnp.int32, (G, lanes), 1)
        lo = g_idx * num_classes
        expand = jnp.logical_and(l_idx >= lo, l_idx < lo + num_classes).astype(jnp.float32)
        # Exact expansion: each output lane sums exactly one weight * 1.0.
        w_exp = jnp.dot(w, expand, preferred_element_type=jnp.float32,
                        precision=jax.lax.Precision.HIGHEST)
        o_ref[...] = (loss * w_exp).astype(o_ref.dtype)

    return kernel


def _make_elementwise_weight_kernel(gamma, alpha):
    """Fallback: weights already have one value per output element."""
    gamma = float(gamma)
    alpha = float(alpha)

    def kernel(x_ref, t_ref, w_ref, o_ref):
        x = x_ref[...].astype(jnp.float32)
        t = t_ref[...].astype(jnp.float32)
        w = w_ref[...].astype(jnp.float32)
        o_ref[...] = (_focal_terms(x, t, gamma, alpha) * w).astype(o_ref.dtype)

    return kernel


# -------------------------------------------------------------------------- tiling helpers
def _choose_block_rows(R, lanes):
    if R <= 16:
        return int(R)                                   # one full-extent block (always legal)
    cap = max(16, ((_BLOCK_BYTES // (lanes * 4)) // 16) * 16)   # ~1 MiB f32 per array / block
    want = pl.cdiv(R, 8)                                # aim for >= ~8 grid steps
    want = ((want + 15) // 16) * 16                     # sublane multiple of 16 (bf16-safe)
    return int(max(16, min(cap, want)))


def _pad_to(v, n):
    if v.shape[0] == n:
        return v
    return jnp.pad(v, (0, n - v.shape[0]))              # only the <lanes ragged tail


def _unflatten(out2d, M, shape):
    out_flat = out2d.reshape(-1)
    if out_flat.shape[0] != M:                          # only in the ragged case
        out_flat = out_flat[:M]
    return out_flat.reshape(shape)


def _run_pallas(kernel, arrays, out_dtype, lanes, block_rows):
    R = arrays[0].shape[0]
    in_specs = [pl.BlockSpec((block_rows, a.shape[1]), lambda i: (i, 0)) for a in arrays]
    return pl.pallas_call(
        kernel,
        out_shape=jax.ShapeDtypeStruct((R, lanes), out_dtype),
        grid=(pl.cdiv(R, block_rows),),
        in_specs=in_specs,
        out_specs=pl.BlockSpec((block_rows, lanes), lambda i: (i, 0)),
        compiler_params=pltpu.CompilerParams(dimension_semantics=("parallel",)),
    )(*arrays)


# --------------------------------------------------------------------------------- wrapper
def sigmoid_focal_classification_loss(input, target, weights, gamma=2.0, alpha=0.25):
    """JAX/Pallas equivalent of SigmoidFocalClassificationLoss.forward (no reduction)."""
    input = jnp.asarray(input)
    target = jnp.asarray(target)
    weights = jnp.asarray(weights)

    # Mirror the torch forward's weight-rank handling.
    if weights.ndim == 2 or (weights.ndim == 1 and target.ndim == 2):
        weights = weights[..., None]
    assert weights.ndim == input.ndim

    shape = input.shape
    num_classes = int(shape[-1])
    M = int(np.prod(shape))
    out_dtype = input.dtype

    x_flat = input.reshape(-1)
    t_flat = target.reshape(-1)

    per_anchor = (
        weights.shape[-1] == 1
        and tuple(weights.shape[:-1]) == tuple(shape[:-1])
        and num_classes > 1
    )

    if per_anchor:
        g = math.gcd(num_classes, 128)
        lanes = (128 // g) * num_classes                # lcm(C, 128): lane-dense slab rows
        lanes *= max(1, 512 // lanes)                   # widen to ~512 lanes
        if lanes <= _MAX_LANES:
            G = lanes // num_classes                    # anchors per slab row
            R = pl.cdiv(M, lanes)
            block_rows = _choose_block_rows(R, lanes)
            x2d = _pad_to(x_flat, R * lanes).reshape(R, lanes)
            t2d = _pad_to(t_flat, R * lanes).reshape(R, lanes)
            w2d = _pad_to(weights.reshape(-1), R * G).reshape(R, G)
            kernel = _make_anchor_weight_kernel(gamma, alpha, num_classes, G, lanes)
            out2d = _run_pallas(kernel, [x2d, t2d, w2d], out_dtype, lanes, block_rows)
            return _unflatten(out2d, M, shape)

    # Fallback: weights already elementwise (same shape as input / C == 1), or a class count
    # whose lane-dense slab would be too wide.
    # TODO(synk): on this rare path the per-anchor weight broadcast is materialized by XLA;
    # an in-kernel expansion for arbitrary C would need a cross-lane gather.
    lanes = 512
    R = pl.cdiv(M, lanes)
    block_rows = _choose_block_rows(R, lanes)
    w_flat = jnp.broadcast_to(weights, shape).reshape(-1)
    x2d = _pad_to(x_flat, R * lanes).reshape(R, lanes)
    t2d = _pad_to(t_flat, R * lanes).reshape(R, lanes)
    w2d = _pad_to(w_flat, R * lanes).reshape(R, lanes)
    kernel = _make_elementwise_weight_kernel(gamma, alpha)
    out2d = _run_pallas(kernel, [x2d, t2d, w2d], out_dtype, lanes, block_rows)
    return _unflatten(out2d, M, shape)


class SigmoidFocalClassificationLoss:
    """JAX/Pallas mirror of pcdet's SigmoidFocalClassificationLoss (forward pass)."""

    def __init__(self, gamma: float = 2.0, alpha: float = 0.25):
        self.gamma = gamma
        self.alpha = alpha

    @staticmethod
    def sigmoid_cross_entropy_with_logits(input, target):
        return (jnp.maximum(input, 0.0) - input * target
                + jnp.log1p(jnp.exp(-jnp.abs(input))))

    def __call__(self, input, target, weights):
        return sigmoid_focal_classification_loss(
            input, target, weights, gamma=self.gamma, alpha=self.alpha)


# ------------------------------------------------------------------------------- reference
def _reference_forward(input, target, weights, gamma=2.0, alpha=0.25):
    """Pure-JAX reference with identical semantics to the torch forward."""
    pred_sigmoid = 1.0 / (1.0 + jnp.exp(-input))
    alpha_weight = target * alpha + (1.0 - target) * (1.0 - alpha)
    pt = target * (1.0 - pred_sigmoid) + (1.0 - target) * pred_sigmoid
    focal_weight = alpha_weight * jnp.power(pt, gamma)
    bce = jnp.maximum(input, 0.0) - input * target + jnp.log1p(jnp.exp(-jnp.abs(input)))
    loss = focal_weight * bce
    if weights.ndim == 2 or (weights.ndim == 1 and target.ndim == 2):
        weights = weights[..., None]
    return loss * weights


if __name__ == "__main__":
    loss_mod = SigmoidFocalClassificationLoss(gamma=2.0, alpha=0.25)

    def _make_inputs(key, B, A, C, logit_dtype=jnp.float32):
        k1, k2, k3 = jax.random.split(key, 3)
        logits = (3.0 * jax.random.normal(k1, (B, A, C), dtype=jnp.float32)).astype(logit_dtype)
        labels = jax.random.randint(k2, (B, A), 0, C)
        target = jax.nn.one_hot(labels, C, dtype=jnp.float32)
        weights = jax.random.uniform(k3, (B, A), dtype=jnp.float32)
        return logits, target, weights

    keys = jax.random.split(jax.random.PRNGKey(0), 4)

    # 1) Small aligned case (B, #anchors, #classes) = (2, 512, 4): per-anchor weights,
    #    in-kernel class-axis weight expansion.
    logits, target, weights = _make_inputs(keys[0], 2, 512, 4)
    out = jax.block_until_ready(loss_mod(logits, target, weights))
    ref = _reference_forward(logits, target, weights)
    np.testing.assert_allclose(np.asarray(out), np.asarray(ref), rtol=3e-5, atol=3e-6)

    # 2) Ragged, multi-block case with C=3 (pcdet-style): lanes=384, partial trailing block.
    logits, target, weights = _make_inputs(keys[1], 2, 1500, 3)
    out = jax.block_until_ready(loss_mod(logits, target, weights))
    ref = _reference_forward(logits, target, weights)
    np.testing.assert_allclose(np.asarray(out), np.asarray(ref), rtol=3e-5, atol=3e-6)

    # 3) Elementwise (full-shape) weights -> pre-expanded fallback kernel.
    logits, target, weights = _make_inputs(keys[2], 2, 128, 4)
    w_full = jnp.broadcast_to(weights[..., None], logits.shape)
    out = jax.block_until_ready(loss_mod(logits, target, w_full))
    ref = _reference_forward(logits, target, w_full)
    np.testing.assert_allclose(np.asarray(out), np.asarray(ref), rtol=3e-5, atol=3e-6)

    # 4) bf16 logits: kernel reads bf16, computes in f32, writes bf16 output directly.
    logits, target, weights = _make_inputs(keys[3], 2, 1024, 4, logit_dtype=jnp.bfloat16)
    out = jax.block_until_ready(loss_mod(logits, target, weights))
    assert out.dtype == jnp.bfloat16
    ref = _reference_forward(logits.astype(jnp.float32), target, weights)
    np.testing.assert_allclose(np.asarray(out.astype(jnp.float32)), np.asarray(ref),
                               rtol=2e-2, atol=1e-5)

    print("KERNEL_OK")
</pallas_src>

<mosaic_0001>
module attributes {stable_mosaic.version = 11 : i64} {
  func.func @kernel(%arg0: i32, %arg1: memref<8x512xf32, #tpu.memory_space<vmem>>, %arg2: memref<8x512xf32, #tpu.memory_space<vmem>>, %arg3: memref<8x128xf32, #tpu.memory_space<vmem>>, %arg4: memref<8x512xf32, #tpu.memory_space<vmem>>) attributes {dimension_semantics = [#tpu.dimension_semantics<parallel>], iteration_bounds = array<i64: 1>, scalar_prefetch = 0 : i64, scratch_operands = 0 : i64, tpu.core_type = #tpu.core_type<tc>, window_params = [{transform_indices = @transform_0, window_bounds = array<i64: 8, 512>}, {transform_indices = @transform_1, window_bounds = array<i64: 8, 512>}, {transform_indices = @transform_2, window_bounds = array<i64: 8, 128>}, {transform_indices = @transform_3, window_bounds = array<i64: 8, 512>}]} {
    %c0 = arith.constant 0 : index
    %c0_0 = arith.constant 0 : index
    %0 = vector.load %arg1[%c0, %c0_0] : memref<8x512xf32, #tpu.memory_space<vmem>>, vector<8x512xf32>
    %c0_1 = arith.constant 0 : index
    %c0_2 = arith.constant 0 : index
    %1 = vector.load %arg2[%c0_1, %c0_2] : memref<8x512xf32, #tpu.memory_space<vmem>>, vector<8x512xf32>
    %c0_3 = arith.constant 0 : index
    %c0_4 = arith.constant 0 : index
    %2 = vector.load %arg3[%c0_3, %c0_4] : memref<8x128xf32, #tpu.memory_space<vmem>>, vector<8x128xf32>
    %3 = math.absf %0 : vector<8x512xf32>
    %cst = arith.constant 0.000000e+00 : f32
    %4 = vector.broadcast %cst : f32 to vector<8x512xf32>
    %5 = arith.subf %4, %3 : vector<8x512xf32>
    %6 = math.exp %5 : vector<8x512xf32>
    %cst_5 = arith.constant 1.000000e+00 : f32
    %7 = vector.broadcast %cst_5 : f32 to vector<8x512xf32>
    %8 = arith.addf %7, %6 : vector<8x512xf32>
    %cst_6 = arith.constant 1.000000e+00 : f32
    %9 = vector.broadcast %cst_6 : f32 to vector<8x512xf32>
    %10 = arith.divf %9, %8 : vector<8x512xf32>
    %cst_7 = arith.constant 0.000000e+00 : f32
    %11 = vector.broadcast %cst_7 : f32 to vector<8x512xf32>
    %12 = arith.cmpf oge, %0, %11 : vector<8x512xf32>
    %13 = arith.mulf %6, %10 : vector<8x512xf32>
    %14 = arith.select %12, %10, %13 : vector<8x512xi1>, vector<8x512xf32>
    %cst_8 = arith.constant -5.000000e-01 : f32
    %15 = vector.broadcast %cst_8 : f32 to vector<8x512xf32>
    %16 = arith.mulf %1, %15 : vector<8x512xf32>
    %cst_9 = arith.constant 7.500000e-01 : f32
    %17 = vector.broadcast %cst_9 : f32 to vector<8x512xf32>
    %18 = arith.addf %17, %16 : vector<8x512xf32>
    %cst_10 = arith.constant 2.000000e+00 : f32
    %19 = vector.broadcast %cst_10 : f32 to vector<8x512xf32>
    %20 = arith.mulf %19, %14 : vector<8x512xf32>
    %cst_11 = arith.constant 1.000000e+00 : f32
    %21 = vector.broadcast %cst_11 : f32 to vector<8x512xf32>
    %22 = arith.subf %21, %20 : vector<8x512xf32>
    %23 = arith.mulf %1, %22 : vector<8x512xf32>
    %24 = arith.addf %14, %23 : vector<8x512xf32>
    %25 = arith.mulf %24, %24 : vector<8x512xf32>
    %cst_12 = arith.constant 0.000000e+00 : f32
    %26 = vector.broadcast %cst_12 : f32 to vector<8x512xf32>
    %27 = arith.maximumf %0, %26 : vector<8x512xf32>
    %28 = arith.mulf %0, %1 : vector<8x512xf32>
    %29 = arith.subf %27, %28 : vector<8x512xf32>
    %30 = math.log1p %6 : vector<8x512xf32>
    %31 = arith.addf %29, %30 : vector<8x512xf32>
    %32 = arith.mulf %18, %25 : vector<8x512xf32>
    %33 = arith.mulf %32, %31 : vector<8x512xf32>
    %34 = tpu.iota {dimensions = array<i32: 0>} : vector<128x512xi32>
    %35 = tpu.iota {dimensions = array<i32: 1>} : vector<128x512xi32>
    %c4_i32 = arith.constant 4 : i32
    %36 = vector.broadcast %c4_i32 : i32 to vector<128x512xi32>
    %37 = arith.muli %34, %36 : vector<128x512xi32>
    %38 = arith.cmpi sge, %35, %37 : vector<128x512xi32>
    %c4_i32_13 = arith.constant 4 : i32
    %39 = vector.broadcast %c4_i32_13 : i32 to vector<128x512xi32>
    %40 = arith.addi %37, %39 : vector<128x512xi32>
    %41 = arith.cmpi slt, %35, %40 : vector<128x512xi32>
    %42 = arith.andi %38, %41 : vector<128x512xi1>
    %43 = arith.extui %42 : vector<128x512xi1> to vector<128x512xi32>
    %44 = arith.sitofp %43 : vector<128x512xi32> to vector<128x512xf32>
    %cst_14 = arith.constant dense<0.000000e+00> : vector<8x512xf32>
    %45 = tpu.matmul %2, %44, %cst_14 {dimension_numbers = #tpu.dot_dimension_numbers<[1], [0], [0], [1], [0, 0, 1, 1], [], []>, precision = #tpu.contract_precision<fp32>} : vector<8x128xf32>, vector<128x512xf32>, vector<8x512xf32> -> vector<8x512xf32>
    %46 = arith.mulf %33, %45 : vector<8x512xf32>
    %c0_15 = arith.constant 0 : index
    %c0_16 = arith.constant 0 : index
    %47 = vector.load %arg4[%c0_15, %c0_16] : memref<8x512xf32, #tpu.memory_space<vmem>>, vector<8x512xf32>
    tpu.vector_store %arg4[%c0_15, %c0_16], %46 {strides = array<i32>} : memref<8x512xf32, #tpu.memory_space<vmem>>, vector<8x512xf32>,
    return
  }
  func.func @transform_0(%arg0: i32) -> (i32, i32) {
    %c0_i32 = arith.constant 0 : i32
    %c0_i32_0 = arith.constant 0 : i32
    return %arg0, %c0_i32 : i32, i32
  }
  func.func @transform_1(%arg0: i32) -> (i32, i32) {
    %c0_i32 = arith.constant 0 : i32
    %c0_i32_0 = arith.constant 0 : i32
    return %arg0, %c0_i32 : i32, i32
  }
  func.func @transform_2(%arg0: i32) -> (i32, i32) {
    %c0_i32 = arith.constant 0 : i32
    %c0_i32_0 = arith.constant 0 : i32
    return %arg0, %c0_i32 : i32, i32
  }
  func.func @transform_3(%arg0: i32) -> (i32, i32) {
    %c0_i32 = arith.constant 0 : i32
    %c0_i32_0 = arith.constant 0 : i32
    return %arg0, %c0_i32 : i32, i32
  }
}

</mosaic_0001>

<llo_original>
// kernel: tpu_custom_call.1
$region0: #{tpu_custom_call.1}
  #allocation0 [shape = 'u32[]', space=smem, size = 0x4, offset = 0x4, fixed_abs, tag = 'smem constant byte address 0x4 - core index']
  #allocation1 [shape = 'u32[72,128]{1,0:T(1,128)}', space=vmem, size = 0x9000, scoped, tag = 'internal scratch']
  %s0 = inlined_call_operand.hbm [shape: f32[8,512], index: 0, kind: input, shape index: {}]
  %s1 = inlined_call_operand.hbm [shape: f32[8,512], index: 1, kind: input, shape index: {}]
  %s2 = inlined_call_operand.hbm [shape: f32[8,128], index: 2, kind: input, shape index: {}]
  %s3 = inlined_call_operand.hbm [shape: f32[8,512], index: 3, kind: output, shape index: {}]
  %s4 = sld [smem:[#allocation0]]
  $region34: #{tpu_custom_call.1} parent=0
    _
  %s6 = ssub.s32 1, %s4
  %s7 = scalar_select 0, %s6, %s4
  $region1: #{tpu_custom_call.1} parent=0
    #allocation2 [shape = 'u8[16384]{0}', space=vmem, size = 0x4000, scoped, tag = 'input window, operand 0, single buffered']
    #allocation3 [shape = 's32[1]{0}', space=sflag, size = 0x4, scoped, tag = 'scoped memory for tpu_custom_call.1']
    #allocation4 [shape = 's32[1]{0}', space=sflag, size = 0x4, scoped, tag = 'scoped memory for tpu_custom_call.1']
    #allocation5 [shape = 'u8[16384]{0}', space=vmem, size = 0x4000, scoped, tag = 'input window, operand 1, single buffered']
    #allocation6 [shape = 's32[1]{0}', space=sflag, size = 0x4, scoped, tag = 'scoped memory for tpu_custom_call.1']
    #allocation7 [shape = 'u8[4096]{0}', space=vmem, size = 0x1000, scoped, tag = 'input window, operand 2, single buffered']
    #allocation8 [shape = 'u8[16384]{0}', space=vmem, size = 0x4000, scoped, tag = 'output window, operand 0, single buffered']
    %8 = vsyncpa [#allocation3], 0
    %9 = vsyncpa [#allocation6], 0
    %10 = vsyncpa [#allocation4], 0
    // Predicated region
    $region2: #{tpu_custom_call.1} parent=1 // pred_check
      _
    $region3: #{tpu_custom_call.1} parent=1 // pred_check_branch
      %12 = sbr.rel (0) target = $region5
    $region4: #{tpu_custom_call.1} parent=1 // pred_region
      %14 = vsyncadd [#allocation3], 0
      %s16 = sshll.u32 %s0, 4
      %s17 = int_to_ptr.hbm [resolvable:$true] %s16
      %s18 = sshll.u32 [#allocation2], 4
      %s19 = int_to_ptr.vmem [resolvable:$true] %s18
      %21 = dma.hbm_to_vmem [thread:$0]  %s17, 512, %s19, [#allocation3]
    $region5: #{tpu_custom_call.1} parent=1 // pred_fallthru
      _
    // Predicated region
    $region6: #{tpu_custom_call.1} parent=1 // pred_check
      _
    $region7: #{tpu_custom_call.1} parent=1 // pred_check_branch
      %23 = sbr.rel (0) target = $region9
    $region8: #{tpu_custom_call.1} parent=1 // pred_region
      %25 = vsyncadd [#allocation6], 0
      %s27 = sshll.u32 %s1, 4
      %s28 = int_to_ptr.hbm [resolvable:$true] %s27
      %s29 = sshll.u32 [#allocation5], 4
      %s30 = int_to_ptr.vmem [resolvable:$true] %s29
      %32 = dma.hbm_to_vmem [thread:$0]  %s28, 512, %s30, [#allocation6]
    $region9: #{tpu_custom_call.1} parent=1 // pred_fallthru
      _
    // Predicated region
    $region10: #{tpu_custom_call.1} parent=1 // pred_check
      _
    $region11: #{tpu_custom_call.1} parent=1 // pred_check_branch
      %34 = sbr.rel (0) target = $region13
    $region12: #{tpu_custom_call.1} parent=1 // pred_region
      %36 = vsyncadd [#allocation6], 0
      %s38 = sshll.u32 %s2, 4
      %s39 = int_to_ptr.hbm [resolvable:$true] %s38
      %s40 = sshll.u32 [#allocation7], 4
      %s41 = int_to_ptr.vmem [resolvable:$true] %s40
      %43 = dma.hbm_to_vmem [thread:$0]  %s39, 128, %s41, [#allocation6]
    $region13: #{tpu_custom_call.1} parent=1 // pred_fallthru
      _
    // Predicated region
    $region14: #{tpu_custom_call.1} parent=1 // pred_check
      _
    $region15: #{tpu_custom_call.1} parent=1 // pred_check_branch
      %45 = sbr.rel (0) target = $region17
    $region16: #{tpu_custom_call.1} parent=1 // pred_region
      %47 = dma.done [#allocation3], 512
    $region17: #{tpu_custom_call.1} parent=1 // pred_fallthru
      _
    // Predicated region
    $region18: #{tpu_custom_call.1} parent=1 // pred_check
      _
    $region19: #{tpu_custom_call.1} parent=1 // pred_check_branch
      %49 = sbr.rel (0) target = $region21
    $region20: #{tpu_custom_call.1} parent=1 // pred_region
      %51 = dma.done [#allocation6], 512
    $region21: #{tpu_custom_call.1} parent=1 // pred_fallthru
      _
    // Predicated region
    $region22: #{tpu_custom_call.1} parent=1 // pred_check
      _
    $region23: #{tpu_custom_call.1} parent=1 // pred_check_branch
      %53 = sbr.rel (0) target = $region25
    $region24: #{tpu_custom_call.1} parent=1 // pred_region
      %55 = dma.done [#allocation6], 128
    $region25: #{tpu_custom_call.1} parent=1 // pred_fallthru
      _
    %v56 = vld [vmem:[#allocation2] sm:$0xff]
    %v57 = vld [vmem:[#allocation2 + $0x8] sm:$0xff]
    %v58 = vld [vmem:[#allocation2 + $0x10] sm:$0xff]
    %v59 = vld [vmem:[#allocation2 + $0x18] sm:$0xff]
    %v60 = vld [vmem:[#allocation5] sm:$0xff]
    %v61 = vld [vmem:[#allocation5 + $0x8] sm:$0xff]
    %v62 = vld [vmem:[#allocation5 + $0x10] sm:$0xff]
    %v63 = vld [vmem:[#allocation5 + $0x18] sm:$0xff]
    %v64 = vld [vmem:[#allocation7] sm:$0xff]
    %v65 = vand.u32 2147483647, %v56
    %v66 = vand.u32 2147483647, %v57
    %v67 = vand.u32 2147483647, %v58
    %v68 = vand.u32 2147483647, %v59
    %v69 = vsub.f32 0.0, %v65
    %v70 = vsub.f32 0.0, %v66
    %v71 = vsub.f32 0.0, %v67
    %v72 = vsub.f32 0.0, %v68
    %v73 = vmul.f32 %v69, 1.442695
    %v74 = vpow.pop %v73
    %v75 = vmul.f32 %v70, 1.442695
    %v76 = vpow.pop %v75
    %v77 = vmul.f32 %v71, 1.442695
    %v78 = vpow.pop %v77
    %v79 = vmul.f32 %v72, 1.442695
    %v80 = vpow.pop %v79
    %v81 = vadd.f32 %v74, 1.0
    %v82 = vadd.f32 %v76, 1.0
    %v83 = vadd.f32 %v78, 1.0
    %v84 = vadd.f32 %v80, 1.0
    %v85 = vrcp.pop %v81
    %v86 = vmul.f32 %v81, %v85
    %v87 = vsub.f32 1.0, %v86
    %v88 = vmul.f32 %v85, %v87
    %v89 = vadd.f32 %v85, %v88
    %vm90 = vweird.f32 %v81
    %vm91 = vweird.f32 %v85
    %vm92 = vmor %vm90, %vm91
    %v93 = vsel %vm92, %v85, %v89
    %v94 = vand.u32 2147483647, %v81
    %vm95 = vcmp.eq.f32.partialorder %v94, 8.507059e+37
    %v96 = vand.u32 %v81, 2147483648
    %v97 = vor.u32 1.1754944e-38, %v96
    %v98 = vsel %vm95, %v97, %v93
    %v99 = vmul.f32 1.0, %v98
    %v100 = vrcp.pop %v82
    %v101 = vmul.f32 %v82, %v100
    %v102 = vsub.f32 1.0, %v101
    %v103 = vmul.f32 %v100, %v102
    %v104 = vadd.f32 %v100, %v103
    %vm105 = vweird.f32 %v82
    %vm106 = vweird.f32 %v100
    %vm107 = vmor %vm105, %vm106
    %v108 = vsel %vm107, %v100, %v104
    %v109 = vand.u32 2147483647, %v82
    %vm110 = vcmp.eq.f32.partialorder %v109, 8.507059e+37
    %v111 = vand.u32 %v82, 2147483648
    %v112 = vor.u32 1.1754944e-38, %v111
    %v113 = vsel %vm110, %v112, %v108
    %v114 = vmul.f32 1.0, %v113
    %v115 = vrcp.pop %v83
    %v116 = vmul.f32 %v83, %v115
    %v117 = vsub.f32 1.0, %v116
    %v118 = vmul.f32 %v115, %v117
    %v119 = vadd.f32 %v115, %v118
    %vm120 = vweird.f32 %v83
    %vm121 = vweird.f32 %v115
    %vm122 = vmor %vm120, %vm121
    %v123 = vsel %vm122, %v115, %v119
    %v124 = vand.u32 2147483647, %v83
    %vm125 = vcmp.eq.f32.partialorder %v124, 8.507059e+37
    %v126 = vand.u32 %v83, 2147483648
    %v127 = vor.u32 1.1754944e-38, %v126
    %v128 = vsel %vm125, %v127, %v123
    %v129 = vmul.f32 1.0, %v128
    %v130 = vrcp.pop %v84
    %v131 = vmul.f32 %v84, %v130
    %v132 = vsub.f32 1.0, %v131
    %v133 = vmul.f32 %v130, %v132
    %v134 = vadd.f32 %v130, %v133
    %vm135 = vweird.f32 %v84
    %vm136 = vweird.f32 %v130
    %vm137 = vmor %vm135, %vm136
    %v138 = vsel %vm137, %v130, %v134
    %v139 = vand.u32 2147483647, %v84
    %vm140 = vcmp.eq.f32.partialorder %v139, 8.507059e+37
    %v141 = vand.u32 %v84, 2147483648
    %v142 = vor.u32 1.1754944e-38, %v141
    %v143 = vsel %vm140, %v142, %v138
    %v144 = vmul.f32 1.0, %v143
    %vm145 = vcmp.ge.f32.partialorder %v56, 0.0
    %vm146 = vcmp.ge.f32.partialorder %v57, 0.0
    %vm147 = vcmp.ge.f32.partialorder %v58, 0.0
    %vm148 = vcmp.ge.f32.partialorder %v59, 0.0
    %v149 = vmul.f32 %v74, %v99
    %v150 = vmul.f32 %v76, %v114
    %v151 = vmul.f32 %v78, %v129
    %v152 = vmul.f32 %v80, %v144
    %v153 = vsel %vm145, %v99, %v149
    %v154 = vsel %vm146, %v114, %v150
    %v155 = vsel %vm147, %v129, %v151
    %v156 = vsel %vm148, %v144, %v152
    %v157 = vmul.f32 %v60, -0.5
    %v158 = vmul.f32 %v61, -0.5
    %v159 = vmul.f32 %v62, -0.5
    %v160 = vmul.f32 %v63, -0.5
    %v161 = vadd.f32 %v157, 0.75
    %v162 = vadd.f32 %v158, 0.75
    %v163 = vadd.f32 %v159, 0.75
    %v164 = vadd.f32 %v160, 0.75
    %v165 = vmul.f32 %v153, 2.0
    %v166 = vmul.f32 %v154, 2.0
    %v167 = vmul.f32 %v155, 2.0
    %v168 = vmul.f32 %v156, 2.0
    %v169 = vsub.f32 1.0, %v165
    %v170 = vsub.f32 1.0, %v166
    %v171 = vsub.f32 1.0, %v167
    %v172 = vsub.f32 1.0, %v168
    %v173 = vmul.f32 %v60, %v169
    %v174 = vmul.f32 %v61, %v170
    %v175 = vmul.f32 %v62, %v171
    %v176 = vmul.f32 %v63, %v172
    %v177 = vadd.f32 %v153, %v173
    %v178 = vadd.f32 %v154, %v174
    %v179 = vadd.f32 %v155, %v175
    %v180 = vadd.f32 %v156, %v176
    %v181 = vmul.f32 %v177, %v177
    %v182 = vmul.f32 %v178, %v178
    %v183 = vmul.f32 %v179, %v179
    %v184 = vmul.f32 %v180, %v180
    %v185 = vmax.f32 %v56, 0.0
    %v186 = vmax.f32 %v57, 0.0
    %v187 = vmax.f32 %v58, 0.0
    %v188 = vmax.f32 %v59, 0.0
    %v189 = vmul.f32 %v56, %v60
    %v190 = vmul.f32 %v57, %v61
    %v191 = vmul.f32 %v58, %v62
    %v192 = vmul.f32 %v59, %v63
    %v193 = vsub.f32 %v185, %v189
    %v194 = vsub.f32 %v186, %v190
    %v195 = vsub.f32 %v187, %v191
    %v196 = vsub.f32 %v188, %v192
    %v197 = vadd.f32 %v74, 1.0
    %v198 = vlog2.pop %v197
    %v199 = vmul.f32 %v198, 0.6931472
    %v200 = vmul.f32 -0.5, %v74
    %v201 = vadd.f32 %v200, 1.0
    %v202 = vmul.f32 %v201, %v74
    %v203 = vand.u32 2147483647, %v74
    %vm204 = vcmp.lt.f32.partialorder %v203, 0.0004427343
    %v205 = vsel %vm204, %v202, %v199
    %v206 = vadd.f32 %v76, 1.0
    %v207 = vlog2.pop %v206
    %v208 = vmul.f32 %v207, 0.6931472
    %v209 = vmul.f32 -0.5, %v76
    %v210 = vadd.f32 %v209, 1.0
    %v211 = vmul.f32 %v210, %v76
    %v212 = vand.u32 2147483647, %v76
    %vm213 = vcmp.lt.f32.partialorder %v212, 0.0004427343
    %v214 = vsel %vm213, %v211, %v208
    %v215 = vadd.f32 %v78, 1.0
    %v216 = vlog2.pop %v215
    %v217 = vmul.f32 %v216, 0.6931472
    %v218 = vmul.f32 -0.5, %v78
    %v219 = vadd.f32 %v218, 1.0
    %v220 = vmul.f32 %v219, %v78
    %v221 = vand.u32 2147483647, %v78
    %vm222 = vcmp.lt.f32.partialorder %v221, 0.0004427343
    %v223 = vsel %vm222, %v220, %v217
    %v224 = vadd.f32 %v80, 1.0
    %v225 = vlog2.pop %v224
    %v226 = vmul.f32 %v225, 0.6931472
    %v227 = vmul.f32 -0.5, %v80
    %v228 = vadd.f32 %v227, 1.0
    %v229 = vmul.f32 %v228, %v80
    %v230 = vand.u32 2147483647, %v80
    %vm231 = vcmp.lt.f32.partialorder %v230, 0.0004427343
    %v232 = vsel %vm231, %v229, %v226
    %v233 = vadd.f32 %v193, %v205
    %v234 = vadd.f32 %v194, %v214
    %v235 = vadd.f32 %v195, %v223
    %v236 = vadd.f32 %v196, %v232
    %v237 = vmul.f32 %v161, %v181
    %v238 = vmul.f32 %v162, %v182
    %v239 = vmul.f32 %v163, %v183
    %v240 = vmul.f32 %v164, %v184
    %v241 = vmul.f32 %v237, %v233
    %v242 = vmul.f32 %v238, %v234
    %v243 = vmul.f32 %v239, %v235
    %v244 = vmul.f32 %v240, %v236
    %v245 = vlaneseq
    %v246 = vshrl.u32 %v245, 7
    %v247 = vadd.s32 %v246, 8
    %v248 = vadd.s32 %v246, 16
    %v249 = vadd.s32 %v246, 24
    %v250 = vadd.s32 %v246, 32
    %v251 = vadd.s32 %v246, 40
    %v252 = vadd.s32 %v246, 48
    %v253 = vadd.s32 %v246, 56
    %v254 = vadd.s32 %v246, 64
    %v255 = vadd.s32 %v246, 72
    %v256 = vadd.s32 %v246, 80
    %v257 = vadd.s32 %v246, 88
    %v258 = vadd.s32 %v246, 96
    %v259 = vadd.s32 %v246, 104
    %v260 = vadd.s32 %v246, 112
    %v261 = vadd.s32 %v246, 120
    %v262 = vlaneseq
    %v263 = vand.u32 %v262, 127
    %v264 = vadd.s32 %v263, 128
    %v265 = vadd.s32 %v263, 256
    %v266 = vadd.s32 %v263, 384
    %v267 = vmul.u32 %v246, 4
    %v268 = vmul.u32 %v247, 4
    %v269 = vmul.u32 %v248, 4
    %v270 = vmul.u32 %v249, 4
    %v271 = vmul.u32 %v250, 4
    %v272 = vmul.u32 %v251, 4
    %v273 = vmul.u32 %v252, 4
    %v274 = vmul.u32 %v253, 4
    %v275 = vmul.u32 %v254, 4
    %v276 = vmul.u32 %v255, 4
    %v277 = vmul.u32 %v256, 4
    %v278 = vmul.u32 %v257, 4
    %v279 = vmul.u32 %v258, 4
    %v280 = vmul.u32 %v259, 4
    %v281 = vmul.u32 %v260, 4
    %v282 = vmul.u32 %v261, 4
    %vm283 = vcmp.ge.s32.totalorder %v263, %v267
    %vm284 = vcmp.ge.s32.totalorder %v264, %v267
    %vm285 = vcmp.ge.s32.totalorder %v265, %v267
    %vm286 = vcmp.ge.s32.totalorder %v266, %v267
    %vm287 = vcmp.ge.s32.totalorder %v263, %v268
    %vm288 = vcmp.ge.s32.totalorder %v264, %v268
    %vm289 = vcmp.ge.s32.totalorder %v265, %v268
    %vm290 = vcmp.ge.s32.totalorder %v266, %v268
    %vm291 = vcmp.ge.s32.totalorder %v263, %v269
    %vm292 = vcmp.ge.s32.totalorder %v264, %v269
    %vm293 = vcmp.ge.s32.totalorder %v265, %v269
    %vm294 = vcmp.ge.s32.totalorder %v266, %v269
    %vm295 = vcmp.ge.s32.totalorder %v263, %v270
    %vm296 = vcmp.ge.s32.totalorder %v264, %v270
    %vm297 = vcmp.ge.s32.totalorder %v265, %v270
    %vm298 = vcmp.ge.s32.totalorder %v266, %v270
    %vm299 = vcmp.ge.s32.totalorder %v263, %v271
    %vm300 = vcmp.ge.s32.totalorder %v264, %v271
    %vm301 = vcmp.ge.s32.totalorder %v265, %v271
    %vm302 = vcmp.ge.s32.totalorder %v266, %v271
    %vm303 = vcmp.ge.s32.totalorder %v263, %v272
    %vm304 = vcmp.ge.s32.totalorder %v264, %v272
    %vm305 = vcmp.ge.s32.totalorder %v265, %v272
    %vm306 = vcmp.ge.s32.totalorder %v266, %v272
    %vm307 = vcmp.ge.s32.totalorder %v263, %v273
    %vm308 = vcmp.ge.s32.totalorder %v264, %v273
    %vm309 = vcmp.ge.s32.totalorder %v265, %v273
    %vm310 = vcmp.ge.s32.totalorder %v266, %v273
    %vm311 = vcmp.ge.s32.totalorder %v263, %v274
    %vm312 = vcmp.ge.s32.totalorder %v264, %v274
    %vm313 = vcmp.ge.s32.totalorder %v265, %v274
    %vm314 = vcmp.ge.s32.totalorder %v266, %v274
    %vm315 = vcmp.ge.s32.totalorder %v263, %v275
    %vm316 = vcmp.ge.s32.totalorder %v264, %v275
    %vm317 = vcmp.ge.s32.totalorder %v265, %v275
    %vm318 = vcmp.ge.s32.totalorder %v266, %v275
    %vm319 = vcmp.ge.s32.totalorder %v263, %v276
    %vm320 = vcmp.ge.s32.totalorder %v264, %v276
    %vm321 = vcmp.ge.s32.totalorder %v265, %v276
    %vm322 = vcmp.ge.s32.totalorder %v266, %v276
    %vm323 = vcmp.ge.s32.totalorder %v263, %v277
    %vm324 = vcmp.ge.s32.totalorder %v264, %v277
    %vm325 = vcmp.ge.s32.totalorder %v265, %v277
    %vm326 = vcmp.ge.s32.totalorder %v266, %v277
    %vm327 = vcmp.ge.s32.totalorder %v263, %v278
    %vm328 = vcmp.ge.s32.totalorder %v264, %v278
    %vm329 = vcmp.ge.s32.totalorder %v265, %v278
    %vm330 = vcmp.ge.s32.totalorder %v266, %v278
    %vm331 = vcmp.ge.s32.totalorder %v263, %v279
    %vm332 = vcmp.ge.s32.totalorder %v264, %v279
    %vm333 = vcmp.ge.s32.totalorder %v265, %v279
    %vm334 = vcmp.ge.s32.totalorder %v266, %v279
    %vm335 = vcmp.ge.s32.totalorder %v263, %v280
    %vm336 = vcmp.ge.s32.totalorder %v264, %v280
    %vm337 = vcmp.ge.s32.totalorder %v265, %v280
    %vm338 = vcmp.ge.s32.totalorder %v266, %v280
    %vm339 = vcmp.ge.s32.totalorder %v263, %v281
    %vm340 = vcmp.ge.s32.totalorder %v264, %v281
    %vm341 = vcmp.ge.s32.totalorder %v265, %v281
    %vm342 = vcmp.ge.s32.totalorder %v266, %v281
    %vm343 = vcmp.ge.s32.totalorder %v263, %v282
    %vm344 = vcmp.ge.s32.totalorder %v264, %v282
    %vm345 = vcmp.ge.s32.totalorder %v265, %v282
    %vm346 = vcmp.ge.s32.totalorder %v266, %v282
    %v347 = vadd.s32 %v267, 4
    %v348 = vadd.s32 %v268, 4
    %v349 = vadd.s32 %v269, 4
    %v350 = vadd.s32 %v270, 4
    %v351 = vadd.s32 %v271, 4
    %v352 = vadd.s32 %v272, 4
    %v353 = vadd.s32 %v273, 4
    %v354 = vadd.s32 %v274, 4
    %v355 = vadd.s32 %v275, 4
    %v356 = vadd.s32 %v276, 4
    %v357 = vadd.s32 %v277, 4
    %v358 = vadd.s32 %v278, 4
    %v359 = vadd.s32 %v279, 4
    %v360 = vadd.s32 %v280, 4
    %v361 = vadd.s32 %v281, 4
    %v362 = vadd.s32 %v282, 4
    %vm363 = vcmp.lt.s32.totalorder %v263, %v347
    %vm364 = vcmp.lt.s32.totalorder %v264, %v347
    %vm365 = vcmp.lt.s32.totalorder %v265, %v347
    %vm366 = vcmp.lt.s32.totalorder %v266, %v347
    %vm367 = vcmp.lt.s32.totalorder %v263, %v348
    %vm368 = vcmp.lt.s32.totalorder %v264, %v348
    %vm369 = vcmp.lt.s32.totalorder %v265, %v348
    %vm370 = vcmp.lt.s32.totalorder %v266, %v348
    %vm371 = vcmp.lt.s32.totalorder %v263, %v349
    %vm372 = vcmp.lt.s32.totalorder %v264, %v349
    %vm373 = vcmp.lt.s32.totalorder %v265, %v349
    %vm374 = vcmp.lt.s32.totalorder %v266, %v349
    %vm375 = vcmp.lt.s32.totalorder %v263, %v350
    %vm376 = vcmp.lt.s32.totalorder %v264, %v350
    %vm377 = vcmp.lt.s32.totalorder %v265, %v350
    %vm378 = vcmp.lt.s32.totalorder %v266, %v350
    %vm379 = vcmp.lt.s32.totalorder %v263, %v351
    %vm380 = vcmp.lt.s32.totalorder %v264, %v351
    %vm381 = vcmp.lt.s32.totalorder %v265, %v351
    %vm382 = vcmp.lt.s32.totalorder %v266, %v351
    %vm383 = vcmp.lt.s32.totalorder %v263, %v352
    %vm384 = vcmp.lt.s32.totalorder %v264, %v352
    %vm385 = vcmp.lt.s32.totalorder %v265, %v352
    %vm386 = vcmp.lt.s32.totalorder %v266, %v352
    %vm387 = vcmp.lt.s32.totalorder %v263, %v353
    %vm388 = vcmp.lt.s32.totalorder %v264, %v353
    %vm389 = vcmp.lt.s32.totalorder %v265, %v353
    %vm390 = vcmp.lt.s32.totalorder %v266, %v353
    %vm391 = vcmp.lt.s32.totalorder %v263, %v354
    %vm392 = vcmp.lt.s32.totalorder %v264, %v354
    %vm393 = vcmp.lt.s32.totalorder %v265, %v354
    %vm394 = vcmp.lt.s32.totalorder %v266, %v354
    %vm395 = vcmp.lt.s32.totalorder %v263, %v355
    %vm396 = vcmp.lt.s32.totalorder %v264, %v355
    %vm397 = vcmp.lt.s32.totalorder %v265, %v355
    %vm398 = vcmp.lt.s32.totalorder %v266, %v355
    %vm399 = vcmp.lt.s32.totalorder %v263, %v356
    %vm400 = vcmp.lt.s32.totalorder %v264, %v356
    %vm401 = vcmp.lt.s32.totalorder %v265, %v356
    %vm402 = vcmp.lt.s32.totalorder %v266, %v356
    %vm403 = vcmp.lt.s32.totalorder %v263, %v357
    %vm404 = vcmp.lt.s32.totalorder %v264, %v357
    %vm405 = vcmp.lt.s32.totalorder %v265, %v357
    %vm406 = vcmp.lt.s32.totalorder %v266, %v357
    %vm407 = vcmp.lt.s32.totalorder %v263, %v358
    %vm408 = vcmp.lt.s32.totalorder %v264, %v358
    %vm409 = vcmp.lt.s32.totalorder %v265, %v358
    %vm410 = vcmp.lt.s32.totalorder %v266, %v358
    %vm411 = vcmp.lt.s32.totalorder %v263, %v359
    %vm412 = vcmp.lt.s32.totalorder %v264, %v359
    %vm413 = vcmp.lt.s32.totalorder %v265, %v359
    %vm414 = vcmp.lt.s32.totalorder %v266, %v359
    %vm415 = vcmp.lt.s32.totalorder %v263, %v360
    %vm416 = vcmp.lt.s32.totalorder %v264, %v360
    %vm417 = vcmp.lt.s32.totalorder %v265, %v360
    %vm418 = vcmp.lt.s32.totalorder %v266, %v360
    %vm419 = vcmp.lt.s32.totalorder %v263, %v361
    %vm420 = vcmp.lt.s32.totalorder %v264, %v361
    %vm421 = vcmp.lt.s32.totalorder %v265, %v361
    %vm422 = vcmp.lt.s32.totalorder %v266, %v361
    %vm423 = vcmp.lt.s32.totalorder %v263, %v362
    %vm424 = vcmp.lt.s32.totalorder %v264, %v362
    %vm425 = vcmp.lt.s32.totalorder %v265, %v362
    %vm426 = vcmp.lt.s32.totalorder %v266, %v362
    %vm427 = vmand %vm283, %vm363
    %vm428 = vmand %vm284, %vm364
    %vm429 = vmand %vm285, %vm365
    %vm430 = vmand %vm286, %vm366
    %vm431 = vmand %vm287, %vm367
    %vm432 = vmand %vm288, %vm368
    %vm433 = vmand %vm289, %vm369
    %vm434 = vmand %vm290, %vm370
    %vm435 = vmand %vm291, %vm371
    %vm436 = vmand %vm292, %vm372
    %vm437 = vmand %vm293, %vm373
    %vm438 = vmand %vm294, %vm374
    %vm439 = vmand %vm295, %vm375
    %vm440 = vmand %vm296, %vm376
    %vm441 = vmand %vm297, %vm377
    %vm442 = vmand %vm298, %vm378
    %vm443 = vmand %vm299, %vm379
    %vm444 = vmand %vm300, %vm380
    %vm445 = vmand %vm301, %vm381
    %vm446 = vmand %vm302, %vm382
    %vm447 = vmand %vm303, %vm383
    %vm448 = vmand %vm304, %vm384
    %vm449 = vmand %vm305, %vm385
    %vm450 = vmand %vm306, %vm386
    %vm451 = vmand %vm307, %vm387
    %vm452 = vmand %vm308, %vm388
    %vm453 = vmand %vm309, %vm389
    %vm454 = vmand %vm310, %vm390
    %vm455 = vmand %vm311, %vm391
    %vm456 = vmand %vm312, %vm392
    %vm457 = vmand %vm313, %vm393
    %vm458 = vmand %vm314, %vm394
    %vm459 = vmand %vm315, %vm395
    %vm460 = vmand %vm316, %vm396
    %vm461 = vmand %vm317, %vm397
    %vm462 = vmand %vm318, %vm398
    %vm463 = vmand %vm319, %vm399
    %vm464 = vmand %vm320, %vm400
    %vm465 = vmand %vm321, %vm401
    %vm466 = vmand %vm322, %vm402
    %vm467 = vmand %vm323, %vm403
    %vm468 = vmand %vm324, %vm404
    %vm469 = vmand %vm325, %vm405
    %vm470 = vmand %vm326, %vm406
    %vm471 = vmand %vm327, %vm407
    %vm472 = vmand %vm328, %vm408
    %vm473 = vmand %vm329, %vm409
    %vm474 = vmand %vm330, %vm410
    %vm475 = vmand %vm331, %vm411
    %vm476 = vmand %vm332, %vm412
    %vm477 = vmand %vm333, %vm413
    %vm478 = vmand %vm334, %vm414
    %vm479 = vmand %vm335, %vm415
    %vm480 = vmand %vm336, %vm416
    %vm481 = vmand %vm337, %vm417
    %vm482 = vmand %vm338, %vm418
    %vm483 = vmand %vm339, %vm419
    %vm484 = vmand %vm340, %vm420
    %vm485 = vmand %vm341, %vm421
    %vm486 = vmand %vm342, %vm422
    %vm487 = vmand %vm343, %vm423
    %vm488 = vmand %vm344, %vm424
    %vm489 = vmand %vm345, %vm425
    %vm490 = vmand %vm346, %vm426
    %v491 = vsel %vm427, 1, 0
    %v492 = vsel %vm428, 1, 0
    %v493 = vsel %vm429, 1, 0
    %v494 = vsel %vm430, 1, 0
    %v495 = vsel %vm431, 1, 0
    %v496 = vsel %vm432, 1, 0
    %v497 = vsel %vm433, 1, 0
    %v498 = vsel %vm434, 1, 0
    %v499 = vsel %vm435, 1, 0
    %v500 = vsel %vm436, 1, 0
    %v501 = vsel %vm437, 1, 0
    %v502 = vsel %vm438, 1, 0
    %v503 = vsel %vm439, 1, 0
    %v504 = vsel %vm440, 1, 0
    %v505 = vsel %vm441, 1, 0
    %v506 = vsel %vm442, 1, 0
    %v507 = vsel %vm443, 1, 0
    %v508 = vsel %vm444, 1, 0
    %v509 = vsel %vm445, 1, 0
    %v510 = vsel %vm446, 1, 0
    %v511 = vsel %vm447, 1, 0
    %v512 = vsel %vm448, 1, 0
    %v513 = vsel %vm449, 1, 0
    %v514 = vsel %vm450, 1, 0
    %v515 = vsel %vm451, 1, 0
    %v516 = vsel %vm452, 1, 0
    %v517 = vsel %vm453, 1, 0
    %v518 = vsel %vm454, 1, 0
    %v519 = vsel %vm455, 1, 0
    %v520 = vsel %vm456, 1, 0
    %v521 = vsel %vm457, 1, 0
    %v522 = vsel %vm458, 1, 0
    %v523 = vsel %vm459, 1, 0
    %v524 = vsel %vm460, 1, 0
    %v525 = vsel %vm461, 1, 0
    %v526 = vsel %vm462, 1, 0
    %v527 = vsel %vm463, 1, 0
    %v528 = vsel %vm464, 1, 0
    %v529 = vsel %vm465, 1, 0
    %v530 = vsel %vm466, 1, 0
    %v531 = vsel %vm467, 1, 0
    %v532 = vsel %vm468, 1, 0
    %v533 = vsel %vm469, 1, 0
    %v534 = vsel %vm470, 1, 0
    %v535 = vsel %vm471, 1, 0
    %v536 = vsel %vm472, 1, 0
    %v537 = vsel %vm473, 1, 0
    %v538 = vsel %vm474, 1, 0
    %v539 = vsel %vm475, 1, 0
    %v540 = vsel %vm476, 1, 0
    %v541 = vsel %vm477, 1, 0
    %v542 = vsel %vm478, 1, 0
    %v543 = vsel %vm479, 1, 0
    %v544 = vsel %vm480, 1, 0
    %v545 = vsel %vm481, 1, 0
    %v546 = vsel %vm482, 1, 0
    %v547 = vsel %vm483, 1, 0
    %v548 = vsel %vm484, 1, 0
    %v549 = vsel %vm485, 1, 0
    %v550 = vsel %vm486, 1, 0
    %v551 = vsel %vm487, 1, 0
    %v552 = vsel %vm488, 1, 0
    %v553 = vsel %vm489, 1, 0
    %v554 = vsel %vm490, 1, 0
    %v555 = vcvt.s32.f32 %v491
    %v556 = vcvt.s32.f32 %v492
    %v557 = vcvt.s32.f32 %v493
    %v558 = vcvt.s32.f32 %v494
    %v559 = vcvt.s32.f32 %v495
    %v560 = vcvt.s32.f32 %v496
    %v561 = vcvt.s32.f32 %v497
    %v562 = vcvt.s32.f32 %v498
    %v563 = vcvt.s32.f32 %v499
    %v564 = vcvt.s32.f32 %v500
    %v565 = vcvt.s32.f32 %v501
    %v566 = vcvt.s32.f32 %v502
    %v567 = vcvt.s32.f32 %v503
    %v568 = vcvt.s32.f32 %v504
    %v569 = vcvt.s32.f32 %v505
    %v570 = vcvt.s32.f32 %v506
    %v571 = vcvt.s32.f32 %v507
    %v572 = vcvt.s32.f32 %v508
    %v573 = vcvt.s32.f32 %v509
    %v574 = vcvt.s32.f32 %v510
    %v575 = vcvt.s32.f32 %v511
    %v576 = vcvt.s32.f32 %v512
    %v577 = vcvt.s32.f32 %v513
    %v578 = vcvt.s32.f32 %v514
    %v579 = vcvt.s32.f32 %v515
    %v580 = vcvt.s32.f32 %v516
    %v581 = vcvt.s32.f32 %v517
    %v582 = vcvt.s32.f32 %v518
    %v583 = vcvt.s32.f32 %v519
    %v584 = vcvt.s32.f32 %v520
    %v585 = vcvt.s32.f32 %v521
    %v586 = vcvt.s32.f32 %v522
    %v587 = vcvt.s32.f32 %v523
    %v588 = vcvt.s32.f32 %v524
    %v589 = vcvt.s32.f32 %v525
    %v590 = vcvt.s32.f32 %v526
    %v591 = vcvt.s32.f32 %v527
    %v592 = vcvt.s32.f32 %v528
    %v593 = vcvt.s32.f32 %v529
    %v594 = vcvt.s32.f32 %v530
    %v595 = vcvt.s32.f32 %v531
    %v596 = vcvt.s32.f32 %v532
    %v597 = vcvt.s32.f32 %v533
    %v598 = vcvt.s32.f32 %v534
    %v599 = vcvt.s32.f32 %v535
    %v600 = vcvt.s32.f32 %v536
    %v601 = vcvt.s32.f32 %v537
    %v602 = vcvt.s32.f32 %v538
    %v603 = vcvt.s32.f32 %v539
    %v604 = vcvt.s32.f32 %v540
    %v605 = vcvt.s32.f32 %v541
    %v606 = vcvt.s32.f32 %v542
    %v607 = vcvt.s32.f32 %v543
    %v608 = vcvt.s32.f32 %v544
    %v609 = vcvt.s32.f32 %v545
    %v610 = vcvt.s32.f32 %v546
    %v611 = vcvt.s32.f32 %v547
    %v612 = vcvt.s32.f32 %v548
    %v613 = vcvt.s32.f32 %v549
    %v614 = vcvt.s32.f32 %v550
    %v615 = vcvt.s32.f32 %v551
    %v616 = vcvt.s32.f32 %v552
    %v617 = vcvt.s32.f32 %v553
    %v618 = vcvt.s32.f32 %v554
    %v619 = vand.u32 %v615, 4294901760
    %620 = vmatpush.msra.mxu0 %v619
    %v621 = vand.u32 %v611, 4294901760
    %622 = vmatpush.msra.mxu0 %v621
    %v623 = vand.u32 %v607, 4294901760
    %624 = vmatpush.msra.mxu0 %v623
    %v625 = vand.u32 %v603, 4294901760
    %626 = vmatpush.msra.mxu0 %v625
    %v627 = vand.u32 %v599, 4294901760
    %628 = vmatpush.msra.mxu0 %v627
    %v629 = vand.u32 %v595, 4294901760
    %630 = vmatpush.msra.mxu0 %v629
    %v631 = vand.u32 %v591, 4294901760
    %632 = vmatpush.msra.mxu0 %v631
    %v633 = vand.u32 %v587, 4294901760
    %634 = vmatpush.msra.mxu0 %v633
    %v635 = vand.u32 %v583, 4294901760
    %636 = vmatpush.msra.mxu0 %v635
    %v637 = vand.u32 %v579, 4294901760
    %638 = vmatpush.msra.mxu0 %v637
    %v639 = vand.u32 %v575, 4294901760
    %640 = vmatpush.msra.mxu0 %v639
    %v641 = vand.u32 %v571, 4294901760
    %642 = vmatpush.msra.mxu0 %v641
    %v643 = vand.u32 %v567, 4294901760
    %644 = vmatpush.msra.mxu0 %v643
    %v645 = vand.u32 %v563, 4294901760
    %646 = vmatpush.msra.mxu0 %v645
    %v647 = vand.u32 %v559, 4294901760
    %648 = vmatpush.msra.mxu0 %v647
    %v649 = vand.u32 %v555, 4294901760
    %650 = vmatpush.msra.mxu0 %v649
    %v651 = vand.u32 %v64, 4294901760
    %v652 = vsub.f32 %v64, %v651
    %v653 = vand.u32 %v652, 4294901760
    %v654 = vsub.f32 %v652, %v653
    %v655 = vand.u32 %v654, 4294901760
    %656 = vmatmul.f32.gmra.mxu0 %v655
    %v657 = vpop.f32.mrf.mxu0
    %v658 = vadd.f32 0.0, %v657
    %659 = vdwg.mxu0
    %v660 = vand.u32 %v615, 4294901760
    %v661 = vsub.f32 %v615, %v660
    %v662 = vand.u32 %v661, 4294901760
    %v663 = vsub.f32 %v661, %v662
    %v664 = vand.u32 %v663, 4294901760
    %665 = vmatpush.msra.mxu0 %v664
    %v666 = vand.u32 %v611, 4294901760
    %v667 = vsub.f32 %v611, %v666
    %v668 = vand.u32 %v667, 4294901760
    %v669 = vsub.f32 %v667, %v668
    %v670 = vand.u32 %v669, 4294901760
    %671 = vmatpush.msra.mxu0 %v670
    %v672 = vand.u32 %v607, 4294901760
    %v673 = vsub.f32 %v607, %v672
    %v674 = vand.u32 %v673, 4294901760
    %v675 = vsub.f32 %v673, %v674
    %v676 = vand.u32 %v675, 4294901760
    %677 = vmatpush.msra.mxu0 %v676
    %v678 = vand.u32 %v603, 4294901760
    %v679 = vsub.f32 %v603, %v678
    %v680 = vand.u32 %v679, 4294901760
    %v681 = vsub.f32 %v679, %v680
    %v682 = vand.u32 %v681, 4294901760
    %683 = vmatpush.msra.mxu0 %v682
    %v684 = vand.u32 %v599, 4294901760
    %v685 = vsub.f32 %v599, %v684
    %v686 = vand.u32 %v685, 4294901760
    %v687 = vsub.f32 %v685, %v686
    %v688 = vand.u32 %v687, 4294901760
    %689 = vmatpush.msra.mxu0 %v688
    %v690 = vand.u32 %v595, 4294901760
    %v691 = vsub.f32 %v595, %v690
    %v692 = vand.u32 %v691, 4294901760
    %v693 = vsub.f32 %v691, %v692
    %v694 = vand.u32 %v693, 4294901760
    %695 = vmatpush.msra.mxu0 %v694
    %v696 = vand.u32 %v591, 4294901760
    %v697 = vsub.f32 %v591, %v696
    %v698 = vand.u32 %v697, 4294901760
    %v699 = vsub.f32 %v697, %v698
    %v700 = vand.u32 %v699, 4294901760
    %701 = vmatpush.msra.mxu0 %v700
    %v702 = vand.u32 %v587, 4294901760
    %v703 = vsub.f32 %v587, %v702
    %v704 = vand.u32 %v703, 4294901760
    %v705 = vsub.f32 %v703, %v704
    %v706 = vand.u32 %v705, 4294901760
    %707 = vmatpush.msra.mxu0 %v706
    %v708 = vand.u32 %v583, 4294901760
    %v709 = vsub.f32 %v583, %v708
    %v710 = vand.u32 %v709, 4294901760
    %v711 = vsub.f32 %v709, %v710
    %v712 = vand.u32 %v711, 4294901760
    %713 = vmatpush.msra.mxu0 %v712
    %v714 = vand.u32 %v579, 4294901760
    %v715 = vsub.f32 %v579, %v714
    %v716 = vand.u32 %v715, 4294901760
    %v717 = vsub.f32 %v715, %v716
    %v718 = vand.u32 %v717, 4294901760
    %719 = vmatpush.msra.mxu0 %v718
    %v720 = vand.u32 %v575, 4294901760
    %v721 = vsub.f32 %v575, %v720
    %v722 = vand.u32 %v721, 4294901760
    %v723 = vsub.f32 %v721, %v722
    %v724 = vand.u32 %v723, 4294901760
    %725 = vmatpush.msra.mxu0 %v724
    %v726 = vand.u32 %v571, 4294901760
    %v727 = vsub.f32 %v571, %v726
    %v728 = vand.u32 %v727, 4294901760
    %v729 = vsub.f32 %v727, %v728
    %v730 = vand.u32 %v729, 4294901760
    %731 = vmatpush.msra.mxu0 %v730
    %v732 = vand.u32 %v567, 4294901760
    %v733 = vsub.f32 %v567, %v732
    %v734 = vand.u32 %v733, 4294901760
    %v735 = vsub.f32 %v733, %v734
    %v736 = vand.u32 %v735, 4294901760
    %737 = vmatpush.msra.mxu0 %v736
    %v738 = vand.u32 %v563, 4294901760
    %v739 = vsub.f32 %v563, %v738
    %v740 = vand.u32 %v739, 4294901760
    %v741 = vsub.f32 %v739, %v740
    %v742 = vand.u32 %v741, 4294901760
    %743 = vmatpush.msra.mxu0 %v742
    %v744 = vand.u32 %v559, 4294901760
    %v745 = vsub.f32 %v559, %v744
    %v746 = vand.u32 %v745, 4294901760
    %v747 = vsub.f32 %v745, %v746
    %v748 = vand.u32 %v747, 4294901760
    %749 = vmatpush.msra.mxu0 %v748
    %v750 = vand.u32 %v555, 4294901760
    %v751 = vsub.f32 %v555, %v750
    %v752 = vand.u32 %v751, 4294901760
    %v753 = vsub.f32 %v751, %v752
    %v754 = vand.u32 %v753, 4294901760
    %755 = vmatpush.msra.mxu0 %v754
    %v756 = vand.u32 %v64, 4294901760
    %757 = vmatmul.f32.gmra.mxu0 %v756
    %v758 = vpop.f32.mrf.mxu0
    %v759 = vadd.f32 %v658, %v758
    %760 = vdwg.mxu0
    %v761 = vand.u32 %v615, 4294901760
    %v762 = vsub.f32 %v615, %v761
    %763 = vmatpush.msra.mxu0 %v762
    %v764 = vand.u32 %v611, 4294901760
    %v765 = vsub.f32 %v611, %v764
    %766 = vmatpush.msra.mxu0 %v765
    %v767 = vand.u32 %v607, 4294901760
    %v768 = vsub.f32 %v607, %v767
    %769 = vmatpush.msra.mxu0 %v768
    %v770 = vand.u32 %v603, 4294901760
    %v771 = vsub.f32 %v603, %v770
    %772 = vmatpush.msra.mxu0 %v771
    %v773 = vand.u32 %v599, 4294901760
    %v774 = vsub.f32 %v599, %v773
    %775 = vmatpush.msra.mxu0 %v774
    %v776 = vand.u32 %v595, 4294901760
    %v777 = vsub.f32 %v595, %v776
    %778 = vmatpush.msra.mxu0 %v777
    %v779 = vand.u32 %v591, 4294901760
    %v780 = vsub.f32 %v591, %v779
    %781 = vmatpush.msra.mxu0 %v780
    %v782 = vand.u32 %v587, 4294901760
    %v783 = vsub.f32 %v587, %v782
    %784 = vmatpush.msra.mxu0 %v783
    %v785 = vand.u32 %v583, 4294901760
    %v786 = vsub.f32 %v583, %v785
    %787 = vmatpush.msra.mxu0 %v786
    %v788 = vand.u32 %v579, 4294901760
    %v789 = vsub.f32 %v579, %v788
    %790 = vmatpush.msra.mxu0 %v789
    %v791 = vand.u32 %v575, 4294901760
    %v792 = vsub.f32 %v575, %v791
    %793 = vmatpush.msra.mxu0 %v792
    %v794 = vand.u32 %v571, 4294901760
    %v795 = vsub.f32 %v571, %v794
    %796 = vmatpush.msra.mxu0 %v795
    %v797 = vand.u32 %v567, 4294901760
    %v798 = vsub.f32 %v567, %v797
    %799 = vmatpush.msra.mxu0 %v798
    %v800 = vand.u32 %v563, 4294901760
    %v801 = vsub.f32 %v563, %v800
    %802 = vmatpush.msra.mxu0 %v801
    %v803 = vand.u32 %v559, 4294901760
    %v804 = vsub.f32 %v559, %v803
    %805 = vmatpush.msra.mxu0 %v804
    %v806 = vand.u32 %v555, 4294901760
    %v807 = vsub.f32 %v555, %v806
    %808 = vmatpush.msra.mxu0 %v807
    %v809 = vand.u32 %v64, 4294901760
    %v810 = vsub.f32 %v64, %v809
    %811 = vmatmul.f32.gmra.mxu0 %v810
    %v812 = vpop.f32.mrf.mxu0
    %v813 = vadd.f32 %v759, %v812
    %814 = vdwg.mxu0
    %v815 = vand.u32 %v615, 4294901760
    %816 = vmatpush.msra.mxu0 %v815
    %v817 = vand.u32 %v611, 4294901760
    %818 = vmatpush.msra.mxu0 %v817
    %v819 = vand.u32 %v607, 4294901760
    %820 = vmatpush.msra.mxu0 %v819
    %v821 = vand.u32 %v603, 4294901760
    %822 = vmatpush.msra.mxu0 %v821
    %v823 = vand.u32 %v599, 4294901760
    %824 = vmatpush.msra.mxu0 %v823
    %v825 = vand.u32 %v595, 4294901760
    %826 = vmatpush.msra.mxu0 %v825
    %v827 = vand.u32 %v591, 4294901760
    %828 = vmatpush.msra.mxu0 %v827
    %v829 = vand.u32 %v587, 4294901760
    %830 = vmatpush.msra.mxu0 %v829
    %v831 = vand.u32 %v583, 4294901760
    %832 = vmatpush.msra.mxu0 %v831
    %v833 = vand.u32 %v579, 4294901760
    %834 = vmatpush.msra.mxu0 %v833
    %v835 = vand.u32 %v575, 4294901760
    %836 = vmatpush.msra.mxu0 %v835
    %v837 = vand.u32 %v571, 4294901760
    %838 = vmatpush.msra.mxu0 %v837
    %v839 = vand.u32 %v567, 4294901760
    %840 = vmatpush.msra.mxu0 %v839
    %v841 = vand.u32 %v563, 4294901760
    %842 = vmatpush.msra.mxu0 %v841
    %v843 = vand.u32 %v559, 4294901760
    %844 = vmatpush.msra.mxu0 %v843
    %v845 = vand.u32 %v555, 4294901760
    %846 = vmatpush.msra.mxu0 %v845
    %v847 = vand.u32 %v64, 4294901760
    %v848 = vsub.f32 %v64, %v847
    %v849 = vand.u32 %v848, 4294901760
    %850 = vmatmul.f32.gmra.mxu0 %v849
    %v851 = vpop.f32.mrf.mxu0
    %v852 = vadd.f32 %v813, %v851
    %853 = vdwg.mxu0
    %v854 = vand.u32 %v615, 4294901760
    %v855 = vsub.f32 %v615, %v854
    %v856 = vand.u32 %v855, 4294901760
    %857 = vmatpush.msra.mxu0 %v856
    %v858 = vand.u32 %v611, 4294901760
    %v859 = vsub.f32 %v611, %v858
    %v860 = vand.u32 %v859, 4294901760
    %861 = vmatpush.msra.mxu0 %v860
    %v862 = vand.u32 %v607, 4294901760
    %v863 = vsub.f32 %v607, %v862
    %v864 = vand.u32 %v863, 4294901760
    %865 = vmatpush.msra.mxu0 %v864
    %v866 = vand.u32 %v603, 4294901760
    %v867 = vsub.f32 %v603, %v866
    %v868 = vand.u32 %v867, 4294901760
    %869 = vmatpush.msra.mxu0 %v868
    %v870 = vand.u32 %v599, 4294901760
    %v871 = vsub.f32 %v599, %v870
    %v872 = vand.u32 %v871, 4294901760
    %873 = vmatpush.msra.mxu0 %v872
    %v874 = vand.u32 %v595, 4294901760
    %v875 = vsub.f32 %v595, %v874
    %v876 = vand.u32 %v875, 4294901760
    %877 = vmatpush.msra.mxu0 %v876
    %v878 = vand.u32 %v591, 4294901760
    %v879 = vsub.f32 %v591, %v878
    %v880 = vand.u32 %v879, 4294901760
    %881 = vmatpush.msra.mxu0 %v880
    %v882 = vand.u32 %v587, 4294901760
    %v883 = vsub.f32 %v587, %v882
    %v884 = vand.u32 %v883, 4294901760
    %885 = vmatpush.msra.mxu0 %v884
    %v886 = vand.u32 %v583, 4294901760
    %v887 = vsub.f32 %v583, %v886
    %v888 = vand.u32 %v887, 4294901760
    %889 = vmatpush.msra.mxu0 %v888
    %v890 = vand.u32 %v579, 4294901760
    %v891 = vsub.f32 %v579, %v890
    %v892 = vand.u32 %v891, 4294901760
    %893 = vmatpush.msra.mxu0 %v892
    %v894 = vand.u32 %v575, 4294901760
    %v895 = vsub.f32 %v575, %v894
    %v896 = vand.u32 %v895, 4294901760
    %897 = vmatpush.msra.mxu0 %v896
    %v898 = vand.u32 %v571, 4294901760
    %v899 = vsub.f32 %v571, %v898
    %v900 = vand.u32 %v899, 4294901760
    %901 = vmatpush.msra.mxu0 %v900
    %v902 = vand.u32 %v567, 4294901760
    %v903 = vsub.f32 %v567, %v902
    %v904 = vand.u32 %v903, 4294901760
    %905 = vmatpush.msra.mxu0 %v904
    %v906 = vand.u32 %v563, 4294901760
    %v907 = vsub.f32 %v563, %v906
    %v908 = vand.u32 %v907, 4294901760
    %909 = vmatpush.msra.mxu0 %v908
    %v910 = vand.u32 %v559, 4294901760
    %v911 = vsub.f32 %v559, %v910
    %v912 = vand.u32 %v911, 4294901760
    %913 = vmatpush.msra.mxu0 %v912
    %v914 = vand.u32 %v555, 4294901760
    %v915 = vsub.f32 %v555, %v914
    %v916 = vand.u32 %v915, 4294901760
    %917 = vmatpush.msra.mxu0 %v916
    %v918 = vand.u32 %v64, 4294901760
    %919 = vmatmul.f32.gmra.mxu0 %v918
    %v920 = vpop.f32.mrf.mxu0
    %v921 = vadd.f32 %v852, %v920
    %922 = vdwg.mxu0
    %v923 = vand.u32 %v615, 4294901760
    %924 = vmatpush.msra.mxu0 %v923
    %v925 = vand.u32 %v611, 4294901760
    %926 = vmatpush.msra.mxu0 %v925
    %v927 = vand.u32 %v607, 4294901760
    %928 = vmatpush.msra.mxu0 %v927
    %v929 = vand.u32 %v603, 4294901760
    %930 = vmatpush.msra.mxu0 %v929
    %v931 = vand.u32 %v599, 4294901760
    %932 = vmatpush.msra.mxu0 %v931
    %v933 = vand.u32 %v595, 4294901760
    %934 = vmatpush.msra.mxu0 %v933
    %v935 = vand.u32 %v591, 4294901760
    %936 = vmatpush.msra.mxu0 %v935
    %v937 = vand.u32 %v587, 4294901760
    %938 = vmatpush.msra.mxu0 %v937
    %v939 = vand.u32 %v583, 4294901760
    %940 = vmatpush.msra.mxu0 %v939
    %v941 = vand.u32 %v579, 4294901760
    %942 = vmatpush.msra.mxu0 %v941
    %v943 = vand.u32 %v575, 4294901760
    %944 = vmatpush.msra.mxu0 %v943
    %v945 = vand.u32 %v571, 4294901760
    %946 = vmatpush.msra.mxu0 %v945
    %v947 = vand.u32 %v567, 4294901760
    %948 = vmatpush.msra.mxu0 %v947
    %v949 = vand.u32 %v563, 4294901760
    %950 = vmatpush.msra.mxu0 %v949
    %v951 = vand.u32 %v559, 4294901760
    %952 = vmatpush.msra.mxu0 %v951
    %v953 = vand.u32 %v555, 4294901760
    %954 = vmatpush.msra.mxu0 %v953
    %v955 = vand.u32 %v64, 4294901760
    %956 = vmatmul.f32.gmra.mxu0 %v955
    %v957 = vpop.f32.mrf.mxu0
    %v958 = vadd.f32 %v921, %v957
    %959 = vdwg.mxu0
    %v960 = vand.u32 %v616, 4294901760
    %961 = vmatpush.msra.mxu0 %v960
    %v962 = vand.u32 %v612, 4294901760
    %963 = vmatpush.msra.mxu0 %v962
    %v964 = vand.u32 %v608, 4294901760
    %965 = vmatpush.msra.mxu0 %v964
    %v966 = vand.u32 %v604, 4294901760
    %967 = vmatpush.msra.mxu0 %v966
    %v968 = vand.u32 %v600, 4294901760
    %969 = vmatpush.msra.mxu0 %v968
    %v970 = vand.u32 %v596, 4294901760
    %971 = vmatpush.msra.mxu0 %v970
    %v972 = vand.u32 %v592, 4294901760
    %973 = vmatpush.msra.mxu0 %v972
    %v974 = vand.u32 %v588, 4294901760
    %975 = vmatpush.msra.mxu0 %v974
    %v976 = vand.u32 %v584, 4294901760
    %977 = vmatpush.msra.mxu0 %v976
    %v978 = vand.u32 %v580, 4294901760
    %979 = vmatpush.msra.mxu0 %v978
    %v980 = vand.u32 %v576, 4294901760
    %981 = vmatpush.msra.mxu0 %v980
    %v982 = vand.u32 %v572, 4294901760
    %983 = vmatpush.msra.mxu0 %v982
    %v984 = vand.u32 %v568, 4294901760
    %985 = vmatpush.msra.mxu0 %v984
    %v986 = vand.u32 %v564, 4294901760
    %987 = vmatpush.msra.mxu0 %v986
    %v988 = vand.u32 %v560, 4294901760
    %989 = vmatpush.msra.mxu0 %v988
    %v990 = vand.u32 %v556, 4294901760
    %991 = vmatpush.msra.mxu0 %v990
    %v992 = vand.u32 %v64, 4294901760
    %v993 = vsub.f32 %v64, %v992
    %v994 = vand.u32 %v993, 4294901760
    %v995 = vsub.f32 %v993, %v994
    %v996 = vand.u32 %v995, 4294901760
    %997 = vmatmul.f32.gmra.mxu0 %v996
    %v998 = vpop.f32.mrf.mxu0
    %v999 = vadd.f32 0.0, %v998
    %1000 = vdwg.mxu0
    %v1001 = vand.u32 %v616, 4294901760
    %v1002 = vsub.f32 %v616, %v1001
    %v1003 = vand.u32 %v1002, 4294901760
    %v1004 = vsub.f32 %v1002, %v1003
    %v1005 = vand.u32 %v1004, 4294901760
    %1006 = vmatpush.msra.mxu0 %v1005
    %v1007 = vand.u32 %v612, 4294901760
    %v1008 = vsub.f32 %v612, %v1007
    %v1009 = vand.u32 %v1008, 4294901760
    %v1010 = vsub.f32 %v1008, %v1009
    %v1011 = vand.u32 %v1010, 4294901760
    %1012 = vmatpush.msra.mxu0 %v1011
    %v1013 = vand.u32 %v608, 4294901760
    %v1014 = vsub.f32 %v608, %v1013
    %v1015 = vand.u32 %v1014, 4294901760
    %v1016 = vsub.f32 %v1014, %v1015
    %v1017 = vand.u32 %v1016, 4294901760
    %1018 = vmatpush.msra.mxu0 %v1017
    %v1019 = vand.u32 %v604, 4294901760
    %v1020 = vsub.f32 %v604, %v1019
    %v1021 = vand.u32 %v1020, 4294901760
    %v1022 = vsub.f32 %v1020, %v1021
    %v1023 = vand.u32 %v1022, 4294901760
    %1024 = vmatpush.msra.mxu0 %v1023
    %v1025 = vand.u32 %v600, 4294901760
    %v1026 = vsub.f32 %v600, %v1025
    %v1027 = vand.u32 %v1026, 4294901760
    %v1028 = vsub.f32 %v1026, %v1027
    %v1029 = vand.u32 %v1028, 4294901760
    %1030 = vmatpush.msra.mxu0 %v1029
    %v1031 = vand.u32 %v596, 4294901760
    %v1032 = vsub.f32 %v596, %v1031
    %v1033 = vand.u32 %v1032, 4294901760
    %v1034 = vsub.f32 %v1032, %v1033
    %v1035 = vand.u32 %v1034, 4294901760
    %1036 = vmatpush.msra.mxu0 %v1035
    %v1037 = vand.u32 %v592, 4294901760
    %v1038 = vsub.f32 %v592, %v1037
    %v1039 = vand.u32 %v1038, 4294901760
    %v1040 = vsub.f32 %v1038, %v1039
    %v1041 = vand.u32 %v1040, 4294901760
    %1042 = vmatpush.msra.mxu0 %v1041
    %v1043 = vand.u32 %v588, 4294901760
    %v1044 = vsub.f32 %v588, %v1043
    %v1045 = vand.u32 %v1044, 4294901760
    %v1046 = vsub.f32 %v1044, %v1045
    %v1047 = vand.u32 %v1046, 4294901760
    %1048 = vmatpush.msra.mxu0 %v1047
    %v1049 = vand.u32 %v584, 4294901760
    %v1050 = vsub.f32 %v584, %v1049
    %v1051 = vand.u32 %v1050, 4294901760
    %v1052 = vsub.f32 %v1050, %v1051
    %v1053 = vand.u32 %v1052, 4294901760
    %1054 = vmatpush.msra.mxu0 %v1053
    %v1055 = vand.u32 %v580, 4294901760
    %v1056 = vsub.f32 %v580, %v1055
    %v1057 = vand.u32 %v1056, 4294901760
    %v1058 = vsub.f32 %v1056, %v1057
    %v1059 = vand.u32 %v1058, 4294901760
    %1060 = vmatpush.msra.mxu0 %v1059
    %v1061 = vand.u32 %v576, 4294901760
    %v1062 = vsub.f32 %v576, %v1061
    %v1063 = vand.u32 %v1062, 4294901760
    %v1064 = vsub.f32 %v1062, %v1063
    %v1065 = vand.u32 %v1064, 4294901760
    %1066 = vmatpush.msra.mxu0 %v1065
    %v1067 = vand.u32 %v572, 4294901760
    %v1068 = vsub.f32 %v572, %v1067
    %v1069 = vand.u32 %v1068, 4294901760
    %v1070 = vsub.f32 %v1068, %v1069
    %v1071 = vand.u32 %v1070, 4294901760
    %1072 = vmatpush.msra.mxu0 %v1071
    %v1073 = vand.u32 %v568, 4294901760
    %v1074 = vsub.f32 %v568, %v1073
    %v1075 = vand.u32 %v1074, 4294901760
    %v1076 = vsub.f32 %v1074, %v1075
    %v1077 = vand.u32 %v1076, 4294901760
    %1078 = vmatpush.msra.mxu0 %v1077
    %v1079 = vand.u32 %v564, 4294901760
    %v1080 = vsub.f32 %v564, %v1079
    %v1081 = vand.u32 %v1080, 4294901760
    %v1082 = vsub.f32 %v1080, %v1081
    %v1083 = vand.u32 %v1082, 4294901760
    %1084 = vmatpush.msra.mxu0 %v1083
    %v1085 = vand.u32 %v560, 4294901760
    %v1086 = vsub.f32 %v560, %v1085
    %v1087 = vand.u32 %v1086, 4294901760
    %v1088 = vsub.f32 %v1086, %v1087
    %v1089 = vand.u32 %v1088, 4294901760
    %1090 = vmatpush.msra.mxu0 %v1089
    %v1091 = vand.u32 %v556, 4294901760
    %v1092 = vsub.f32 %v556, %v1091
    %v1093 = vand.u32 %v1092, 4294901760
    %v1094 = vsub.f32 %v1092, %v1093
    %v1095 = vand.u32 %v1094, 4294901760
    %1096 = vmatpush.msra.mxu0 %v1095
    %v1097 = vand.u32 %v64, 4294901760
    %1098 = vmatmul.f32.gmra.mxu0 %v1097
    %v1099 = vpop.f32.mrf.mxu0
    %v1100 = vadd.f32 %v999, %v1099
    %1101 = vdwg.mxu0
    %v1102 = vand.u32 %v616, 4294901760
    %v1103 = vsub.f32 %v616, %v1102
    %1104 = vmatpush.msra.mxu0 %v1103
    %v1105 = vand.u32 %v612, 4294901760
    %v1106 = vsub.f32 %v612, %v1105
    %1107 = vmatpush.msra.mxu0 %v1106
    %v1108 = vand.u32 %v608, 4294901760
    %v1109 = vsub.f32 %v608, %v1108
    %1110 = vmatpush.msra.mxu0 %v1109
    %v1111 = vand.u32 %v604, 4294901760
    %v1112 = vsub.f32 %v604, %v1111
    %1113 = vmatpush.msra.mxu0 %v1112
    %v1114 = vand.u32 %v600, 4294901760
    %v1115 = vsub.f32 %v600, %v1114
    %1116 = vmatpush.msra.mxu0 %v1115
    %v1117 = vand.u32 %v596, 4294901760
    %v1118 = vsub.f32 %v596, %v1117
    %1119 = vmatpush.msra.mxu0 %v1118
    %v1120 = vand.u32 %v592, 4294901760
    %v1121 = vsub.f32 %v592, %v1120
    %1122 = vmatpush.msra.mxu0 %v1121
    %v1123 = vand.u32 %v588, 4294901760
    %v1124 = vsub.f32 %v588, %v1123
    %1125 = vmatpush.msra.mxu0 %v1124
    %v1126 = vand.u32 %v584, 4294901760
    %v1127 = vsub.f32 %v584, %v1126
    %1128 = vmatpush.msra.mxu0 %v1127
    %v1129 = vand.u32 %v580, 4294901760
    %v1130 = vsub.f32 %v580, %v1129
    %1131 = vmatpush.msra.mxu0 %v1130
    %v1132 = vand.u32 %v576, 4294901760
    %v1133 = vsub.f32 %v576, %v1132
    %1134 = vmatpush.msra.mxu0 %v1133
    %v1135 = vand.u32 %v572, 4294901760
    %v1136 = vsub.f32 %v572, %v1135
    %1137 = vmatpush.msra.mxu0 %v1136
    %v1138 = vand.u32 %v568, 4294901760
    %v1139 = vsub.f32 %v568, %v1138
    %1140 = vmatpush.msra.mxu0 %v1139
    %v1141 = vand.u32 %v564, 4294901760
    %v1142 = vsub.f32 %v564, %v1141
    %1143 = vmatpush.msra.mxu0 %v1142
    %v1144 = vand.u32 %v560, 4294901760
    %v1145 = vsub.f32 %v560, %v1144
    %1146 = vmatpush.msra.mxu0 %v1145
    %v1147 = vand.u32 %v556, 4294901760
    %v1148 = vsub.f32 %v556, %v1147
    %1149 = vmatpush.msra.mxu0 %v1148
    %v1150 = vand.u32 %v64, 4294901760
    %v1151 = vsub.f32 %v64, %v1150
    %1152 = vmatmul.f32.gmra.mxu0 %v1151
    %v1153 = vpop.f32.mrf.mxu0
    %v1154 = vadd.f32 %v1100, %v1153
    %1155 = vdwg.mxu0
    %v1156 = vand.u32 %v616, 4294901760
    %1157 = vmatpush.msra.mxu0 %v1156
    %v1158 = vand.u32 %v612, 4294901760
    %1159 = vmatpush.msra.mxu0 %v1158
    %v1160 = vand.u32 %v608, 4294901760
    %1161 = vmatpush.msra.mxu0 %v1160
    %v1162 = vand.u32 %v604, 4294901760
    %1163 = vmatpush.msra.mxu0 %v1162
    %v1164 = vand.u32 %v600, 4294901760
    %1165 = vmatpush.msra.mxu0 %v1164
    %v1166 = vand.u32 %v596, 4294901760
    %1167 = vmatpush.msra.mxu0 %v1166
    %v1168 = vand.u32 %v592, 4294901760
    %1169 = vmatpush.msra.mxu0 %v1168
    %v1170 = vand.u32 %v588, 4294901760
    %1171 = vmatpush.msra.mxu0 %v1170
    %v1172 = vand.u32 %v584, 4294901760
    %1173 = vmatpush.msra.mxu0 %v1172
    %v1174 = vand.u32 %v580, 4294901760
    %1175 = vmatpush.msra.mxu0 %v1174
    %v1176 = vand.u32 %v576, 4294901760
    %1177 = vmatpush.msra.mxu0 %v1176
    %v1178 = vand.u32 %v572, 4294901760
    %1179 = vmatpush.msra.mxu0 %v1178
    %v1180 = vand.u32 %v568, 4294901760
    %1181 = vmatpush.msra.mxu0 %v1180
    %v1182 = vand.u32 %v564, 4294901760
    %1183 = vmatpush.msra.mxu0 %v1182
    %v1184 = vand.u32 %v560, 4294901760
    %1185 = vmatpush.msra.mxu0 %v1184
    %v1186 = vand.u32 %v556, 4294901760
    %1187 = vmatpush.msra.mxu0 %v1186
    %v1188 = vand.u32 %v64, 4294901760
    %v1189 = vsub.f32 %v64, %v1188
    %v1190 = vand.u32 %v1189, 4294901760
    %1191 = vmatmul.f32.gmra.mxu0 %v1190
    %v1192 = vpop.f32.mrf.mxu0
    %v1193 = vadd.f32 %v1154, %v1192
    %1194 = vdwg.mxu0
    %v1195 = vand.u32 %v616, 4294901760
    %v1196 = vsub.f32 %v616, %v1195
    %v1197 = vand.u32 %v1196, 4294901760
    %1198 = vmatpush.msra.mxu0 %v1197
    %v1199 = vand.u32 %v612, 4294901760
    %v1200 = vsub.f32 %v612, %v1199
    %v1201 = vand.u32 %v1200, 4294901760
    %1202 = vmatpush.msra.mxu0 %v1201
    %v1203 = vand.u32 %v608, 4294901760
    %v1204 = vsub.f32 %v608, %v1203
    %v1205 = vand.u32 %v1204, 4294901760
    %1206 = vmatpush.msra.mxu0 %v1205
    %v1207 = vand.u32 %v604, 4294901760
    %v1208 = vsub.f32 %v604, %v1207
    %v1209 = vand.u32 %v1208, 4294901760
    %1210 = vmatpush.msra.mxu0 %v1209
    %v1211 = vand.u32 %v600, 4294901760
    %v1212 = vsub.f32 %v600, %v1211
    %v1213 = vand.u32 %v1212, 4294901760
    %1214 = vmatpush.msra.mxu0 %v1213
    %v1215 = vand.u32 %v596, 4294901760
    %v1216 = vsub.f32 %v596, %v1215
    %v1217 = vand.u32 %v1216, 4294901760
    %1218 = vmatpush.msra.mxu0 %v1217
    %v1219 = vand.u32 %v592, 4294901760
    %v1220 = vsub.f32 %v592, %v1219
    %v1221 = vand.u32 %v1220, 4294901760
    %1222 = vmatpush.msra.mxu0 %v1221
    %v1223 = vand.u32 %v588, 4294901760
    %v1224 = vsub.f32 %v588, %v1223
    %v1225 = vand.u32 %v1224, 4294901760
    %1226 = vmatpush.msra.mxu0 %v1225
    %v1227 = vand.u32 %v584, 4294901760
    %v1228 = vsub.f32 %v584, %v1227
    %v1229 = vand.u32 %v1228, 4294901760
    %1230 = vmatpush.msra.mxu0 %v1229
    %v1231 = vand.u32 %v580, 4294901760
    %v1232 = vsub.f32 %v580, %v1231
    %v1233 = vand.u32 %v1232, 4294901760
    %1234 = vmatpush.msra.mxu0 %v1233
    %v1235 = vand.u32 %v576, 4294901760
    %v1236 = vsub.f32 %v576, %v1235
    %v1237 = vand.u32 %v1236, 4294901760
    %1238 = vmatpush.msra.mxu0 %v1237
    %v1239 = vand.u32 %v572, 4294901760
    %v1240 = vsub.f32 %v572, %v1239
    %v1241 = vand.u32 %v1240, 4294901760
    %1242 = vmatpush.msra.mxu0 %v1241
    %v1243 = vand.u32 %v568, 4294901760
    %v1244 = vsub.f32 %v568, %v1243
    %v1245 = vand.u32 %v1244, 4294901760
    %1246 = vmatpush.msra.mxu0 %v1245
    %v1247 = vand.u32 %v564, 4294901760
    %v1248 = vsub.f32 %v564, %v1247
    %v1249 = vand.u32 %v1248, 4294901760
    %1250 = vmatpush.msra.mxu0 %v1249
    %v1251 = vand.u32 %v560, 4294901760
    %v1252 = vsub.f32 %v560, %v1251
    %v1253 = vand.u32 %v1252, 4294901760
    %1254 = vmatpush.msra.mxu0 %v1253
    %v1255 = vand.u32 %v556, 4294901760
    %v1256 = vsub.f32 %v556, %v1255
    %v1257 = vand.u32 %v1256, 4294901760
    %1258 = vmatpush.msra.mxu0 %v1257
    %v1259 = vand.u32 %v64, 4294901760
    %1260 = vmatmul.f32.gmra.mxu0 %v1259
    %v1261 = vpop.f32.mrf.mxu0
    %v1262 = vadd.f32 %v1193, %v1261
    %1263 = vdwg.mxu0
    %v1264 = vand.u32 %v616, 4294901760
    %1265 = vmatpush.msra.mxu0 %v1264
    %v1266 = vand.u32 %v612, 4294901760
    %1267 = vmatpush.msra.mxu0 %v1266
    %v1268 = vand.u32 %v608, 4294901760
    %1269 = vmatpush.msra.mxu0 %v1268
    %v1270 = vand.u32 %v604, 4294901760
    %1271 = vmatpush.msra.mxu0 %v1270
    %v1272 = vand.u32 %v600, 4294901760
    %1273 = vmatpush.msra.mxu0 %v1272
    %v1274 = vand.u32 %v596, 4294901760
    %1275 = vmatpush.msra.mxu0 %v1274
    %v1276 = vand.u32 %v592, 4294901760
    %1277 = vmatpush.msra.mxu0 %v1276
    %v1278 = vand.u32 %v588, 4294901760
    %1279 = vmatpush.msra.mxu0 %v1278
    %v1280 = vand.u32 %v584, 4294901760
    %1281 = vmatpush.msra.mxu0 %v1280
    %v1282 = vand.u32 %v580, 4294901760
    %1283 = vmatpush.msra.mxu0 %v1282
    %v1284 = vand.u32 %v576, 4294901760
    %1285 = vmatpush.msra.mxu0 %v1284
    %v1286 = vand.u32 %v572, 4294901760
    %1287 = vmatpush.msra.mxu0 %v1286
    %v1288 = vand.u32 %v568, 4294901760
    %1289 = vmatpush.msra.mxu0 %v1288
    %v1290 = vand.u32 %v564, 4294901760
    %1291 = vmatpush.msra.mxu0 %v1290
    %v1292 = vand.u32 %v560, 4294901760
    %1293 = vmatpush.msra.mxu0 %v1292
    %v1294 = vand.u32 %v556, 4294901760
    %1295 = vmatpush.msra.mxu0 %v1294
    %v1296 = vand.u32 %v64, 4294901760
    %1297 = vmatmul.f32.gmra.mxu0 %v1296
    %v1298 = vpop.f32.mrf.mxu0
    %v1299 = vadd.f32 %v1262, %v1298
    %1300 = vdwg.mxu0
    %v1301 = vand.u32 %v617, 4294901760
    %1302 = vmatpush.msra.mxu0 %v1301
    %v1303 = vand.u32 %v613, 4294901760
    %1304 = vmatpush.msra.mxu0 %v1303
    %v1305 = vand.u32 %v609, 4294901760
    %1306 = vmatpush.msra.mxu0 %v1305
    %v1307 = vand.u32 %v605, 4294901760
    %1308 = vmatpush.msra.mxu0 %v1307
    %v1309 = vand.u32 %v601, 4294901760
    %1310 = vmatpush.msra.mxu0 %v1309
    %v1311 = vand.u32 %v597, 4294901760
    %1312 = vmatpush.msra.mxu0 %v1311
    %v1313 = vand.u32 %v593, 4294901760
    %1314 = vmatpush.msra.mxu0 %v1313
    %v1315 = vand.u32 %v589, 4294901760
    %1316 = vmatpush.msra.mxu0 %v1315
    %v1317 = vand.u32 %v585, 4294901760
    %1318 = vmatpush.msra.mxu0 %v1317
    %v1319 = vand.u32 %v581, 4294901760
    %1320 = vmatpush.msra.mxu0 %v1319
    %v1321 = vand.u32 %v577, 4294901760
    %1322 = vmatpush.msra.mxu0 %v1321
    %v1323 = vand.u32 %v573, 4294901760
    %1324 = vmatpush.msra.mxu0 %v1323
    %v1325 = vand.u32 %v569, 4294901760
    %1326 = vmatpush.msra.mxu0 %v1325
    %v1327 = vand.u32 %v565, 4294901760
    %1328 = vmatpush.msra.mxu0 %v1327
    %v1329 = vand.u32 %v561, 4294901760
    %1330 = vmatpush.msra.mxu0 %v1329
    %v1331 = vand.u32 %v557, 4294901760
    %1332 = vmatpush.msra.mxu0 %v1331
    %v1333 = vand.u32 %v64, 4294901760
    %v1334 = vsub.f32 %v64, %v1333
    %v1335 = vand.u32 %v1334, 4294901760
    %v1336 = vsub.f32 %v1334, %v1335
    %v1337 = vand.u32 %v1336, 4294901760
    %1338 = vmatmul.f32.gmra.mxu0 %v1337
    %v1339 = vpop.f32.mrf.mxu0
    %v1340 = vadd.f32 0.0, %v1339
    %1341 = vdwg.mxu0
    %v1342 = vand.u32 %v617, 4294901760
    %v1343 = vsub.f32 %v617, %v1342
    %v1344 = vand.u32 %v1343, 4294901760
    %v1345 = vsub.f32 %v1343, %v1344
    %v1346 = vand.u32 %v1345, 4294901760
    %1347 = vmatpush.msra.mxu0 %v1346
    %v1348 = vand.u32 %v613, 4294901760
    %v1349 = vsub.f32 %v613, %v1348
    %v1350 = vand.u32 %v1349, 4294901760
    %v1351 = vsub.f32 %v1349, %v1350
    %v1352 = vand.u32 %v1351, 4294901760
    %1353 = vmatpush.msra.mxu0 %v1352
    %v1354 = vand.u32 %v609, 4294901760
    %v1355 = vsub.f32 %v609, %v1354
    %v1356 = vand.u32 %v1355, 4294901760
    %v1357 = vsub.f32 %v1355, %v1356
    %v1358 = vand.u32 %v1357, 4294901760
    %1359 = vmatpush.msra.mxu0 %v1358
    %v1360 = vand.u32 %v605, 4294901760
    %v1361 = vsub.f32 %v605, %v1360
    %v1362 = vand.u32 %v1361, 4294901760
    %v1363 = vsub.f32 %v1361, %v1362
    %v1364 = vand.u32 %v1363, 4294901760
    %1365 = vmatpush.msra.mxu0 %v1364
    %v1366 = vand.u32 %v601, 4294901760
    %v1367 = vsub.f32 %v601, %v1366
    %v1368 = vand.u32 %v1367, 4294901760
    %v1369 = vsub.f32 %v1367, %v1368
    %v1370 = vand.u32 %v1369, 4294901760
    %1371 = vmatpush.msra.mxu0 %v1370
    %v1372 = vand.u32 %v597, 4294901760
    %v1373 = vsub.f32 %v597, %v1372
    %v1374 = vand.u32 %v1373, 4294901760
    %v1375 = vsub.f32 %v1373, %v1374
    %v1376 = vand.u32 %v1375, 4294901760
    %1377 = vmatpush.msra.mxu0 %v1376
    %v1378 = vand.u32 %v593, 4294901760
    %v1379 = vsub.f32 %v593, %v1378
    %v1380 = vand.u32 %v1379, 4294901760
    %v1381 = vsub.f32 %v1379, %v1380
    %v1382 = vand.u32 %v1381, 4294901760
    %1383 = vmatpush.msra.mxu0 %v1382
    %v1384 = vand.u32 %v589, 4294901760
    %v1385 = vsub.f32 %v589, %v1384
    %v1386 = vand.u32 %v1385, 4294901760
    %v1387 = vsub.f32 %v1385, %v1386
    %v1388 = vand.u32 %v1387, 4294901760
    %1389 = vmatpush.msra.mxu0 %v1388
    %v1390 = vand.u32 %v585, 4294901760
    %v1391 = vsub.f32 %v585, %v1390
    %v1392 = vand.u32 %v1391, 4294901760
    %v1393 = vsub.f32 %v1391, %v1392
    %v1394 = vand.u32 %v1393, 4294901760
    %1395 = vmatpush.msra.mxu0 %v1394
    %v1396 = vand.u32 %v581, 4294901760
    %v1397 = vsub.f32 %v581, %v1396
    %v1398 = vand.u32 %v1397, 4294901760
    %v1399 = vsub.f32 %v1397, %v1398
    %v1400 = vand.u32 %v1399, 4294901760
    %1401 = vmatpush.msra.mxu0 %v1400
    %v1402 = vand.u32 %v577, 4294901760
    %v1403 = vsub.f32 %v577, %v1402
    %v1404 = vand.u32 %v1403, 4294901760
    %v1405 = vsub.f32 %v1403, %v1404
    %v1406 = vand.u32 %v1405, 4294901760
    %1407 = vmatpush.msra.mxu0 %v1406
    %v1408 = vand.u32 %v573, 4294901760
    %v1409 = vsub.f32 %v573, %v1408
    %v1410 = vand.u32 %v1409, 4294901760
    %v1411 = vsub.f32 %v1409, %v1410
    %v1412 = vand.u32 %v1411, 4294901760
    %1413 = vmatpush.msra.mxu0 %v1412
    %v1414 = vand.u32 %v569, 4294901760
    %v1415 = vsub.f32 %v569, %v1414
    %v1416 = vand.u32 %v1415, 4294901760
    %v1417 = vsub.f32 %v1415, %v1416
    %v1418 = vand.u32 %v1417, 4294901760
    %1419 = vmatpush.msra.mxu0 %v1418
    %v1420 = vand.u32 %v565, 4294901760
    %v1421 = vsub.f32 %v565, %v1420
    %v1422 = vand.u32 %v1421, 4294901760
    %v1423 = vsub.f32 %v1421, %v1422
    %v1424 = vand.u32 %v1423, 4294901760
    %1425 = vmatpush.msra.mxu0 %v1424
    %v1426 = vand.u32 %v561, 4294901760
    %v1427 = vsub.f32 %v561, %v1426
    %v1428 = vand.u32 %v1427, 4294901760
    %v1429 = vsub.f32 %v1427, %v1428
    %v1430 = vand.u32 %v1429, 4294901760
    %1431 = vmatpush.msra.mxu0 %v1430
    %v1432 = vand.u32 %v557, 4294901760
    %v1433 = vsub.f32 %v557, %v1432
    %v1434 = vand.u32 %v1433, 4294901760
    %v1435 = vsub.f32 %v1433, %v1434
    %v1436 = vand.u32 %v1435, 4294901760
    %1437 = vmatpush.msra.mxu0 %v1436
    %v1438 = vand.u32 %v64, 4294901760
    %1439 = vmatmul.f32.gmra.mxu0 %v1438
    %v1440 = vpop.f32.mrf.mxu0
    %v1441 = vadd.f32 %v1340, %v1440
    %1442 = vdwg.mxu0
    %v1443 = vand.u32 %v617, 4294901760
    %v1444 = vsub.f32 %v617, %v1443
    %1445 = vmatpush.msra.mxu0 %v1444
    %v1446 = vand.u32 %v613, 4294901760
    %v1447 = vsub.f32 %v613, %v1446
    %1448 = vmatpush.msra.mxu0 %v1447
    %v1449 = vand.u32 %v609, 4294901760
    %v1450 = vsub.f32 %v609, %v1449
    %1451 = vmatpush.msra.mxu0 %v1450
    %v1452 = vand.u32 %v605, 4294901760
    %v1453 = vsub.f32 %v605, %v1452
    %1454 = vmatpush.msra.mxu0 %v1453
    %v1455 = vand.u32 %v601, 4294901760
    %v1456 = vsub.f32 %v601, %v1455
    %1457 = vmatpush.msra.mxu0 %v1456
    %v1458 = vand.u32 %v597, 4294901760
    %v1459 = vsub.f32 %v597, %v1458
    %1460 = vmatpush.msra.mxu0 %v1459
    %v1461 = vand.u32 %v593, 4294901760
    %v1462 = vsub.f32 %v593, %v1461
    %1463 = vmatpush.msra.mxu0 %v1462
    %v1464 = vand.u32 %v589, 4294901760
    %v1465 = vsub.f32 %v589, %v1464
    %1466 = vmatpush.msra.mxu0 %v1465
    %v1467 = vand.u32 %v585, 4294901760
    %v1468 = vsub.f32 %v585, %v1467
    %1469 = vmatpush.msra.mxu0 %v1468
    %v1470 = vand.u32 %v581, 4294901760
    %v1471 = vsub.f32 %v581, %v1470
    %1472 = vmatpush.msra.mxu0 %v1471
    %v1473 = vand.u32 %v577, 4294901760
    %v1474 = vsub.f32 %v577, %v1473
    %1475 = vmatpush.msra.mxu0 %v1474
    %v1476 = vand.u32 %v573, 4294901760
    %v1477 = vsub.f32 %v573, %v1476
    %1478 = vmatpush.msra.mxu0 %v1477
    %v1479 = vand.u32 %v569, 4294901760
    %v1480 = vsub.f32 %v569, %v1479
    %1481 = vmatpush.msra.mxu0 %v1480
    %v1482 = vand.u32 %v565, 4294901760
    %v1483 = vsub.f32 %v565, %v1482
    %1484 = vmatpush.msra.mxu0 %v1483
    %v1485 = vand.u32 %v561, 4294901760
    %v1486 = vsub.f32 %v561, %v1485
    %1487 = vmatpush.msra.mxu0 %v1486
    %v1488 = vand.u32 %v557, 4294901760
    %v1489 = vsub.f32 %v557, %v1488
    %1490 = vmatpush.msra.mxu0 %v1489
    %v1491 = vand.u32 %v64, 4294901760
    %v1492 = vsub.f32 %v64, %v1491
    %1493 = vmatmul.f32.gmra.mxu0 %v1492
    %v1494 = vpop.f32.mrf.mxu0
    %v1495 = vadd.f32 %v1441, %v1494
    %1496 = vdwg.mxu0
    %v1497 = vand.u32 %v617, 4294901760
    %1498 = vmatpush.msra.mxu0 %v1497
    %v1499 = vand.u32 %v613, 4294901760
    %1500 = vmatpush.msra.mxu0 %v1499
    %v1501 = vand.u32 %v609, 4294901760
    %1502 = vmatpush.msra.mxu0 %v1501
    %v1503 = vand.u32 %v605, 4294901760
    %1504 = vmatpush.msra.mxu0 %v1503
    %v1505 = vand.u32 %v601, 4294901760
    %1506 = vmatpush.msra.mxu0 %v1505
    %v1507 = vand.u32 %v597, 4294901760
    %1508 = vmatpush.msra.mxu0 %v1507
    %v1509 = vand.u32 %v593, 4294901760
    %1510 = vmatpush.msra.mxu0 %v1509
    %v1511 = vand.u32 %v589, 4294901760
    %1512 = vmatpush.msra.mxu0 %v1511
    %v1513 = vand.u32 %v585, 4294901760
    %1514 = vmatpush.msra.mxu0 %v1513
    %v1515 = vand.u32 %v581, 4294901760
    %1516 = vmatpush.msra.mxu0 %v1515
    %v1517 = vand.u32 %v577, 4294901760
    %1518 = vmatpush.msra.mxu0 %v1517
    %v1519 = vand.u32 %v573, 4294901760
    %1520 = vmatpush.msra.mxu0 %v1519
    %v1521 = vand.u32 %v569, 4294901760
    %1522 = vmatpush.msra.mxu0 %v1521
    %v1523 = vand.u32 %v565, 4294901760
    %1524 = vmatpush.msra.mxu0 %v1523
    %v1525 = vand.u32 %v561, 4294901760
    %1526 = vmatpush.msra.mxu0 %v1525
    %v1527 = vand.u32 %v557, 4294901760
    %1528 = vmatpush.msra.mxu0 %v1527
    %v1529 = vand.u32 %v64, 4294901760
    %v1530 = vsub.f32 %v64, %v1529
    %v1531 = vand.u32 %v1530, 4294901760
    %1532 = vmatmul.f32.gmra.mxu0 %v1531
    %v1533 = vpop.f32.mrf.mxu0
    %v1534 = vadd.f32 %v1495, %v1533
    %1535 = vdwg.mxu0
    %v1536 = vand.u32 %v617, 4294901760
    %v1537 = vsub.f32 %v617, %v1536
    %v1538 = vand.u32 %v1537, 4294901760
    %1539 = vmatpush.msra.mxu0 %v1538
    %v1540 = vand.u32 %v613, 4294901760
    %v1541 = vsub.f32 %v613, %v1540
    %v1542 = vand.u32 %v1541, 4294901760
    %1543 = vmatpush.msra.mxu0 %v1542
    %v1544 = vand.u32 %v609, 4294901760
    %v1545 = vsub.f32 %v609, %v1544
    %v1546 = vand.u32 %v1545, 4294901760
    %1547 = vmatpush.msra.mxu0 %v1546
    %v1548 = vand.u32 %v605, 4294901760
    %v1549 = vsub.f32 %v605, %v1548
    %v1550 = vand.u32 %v1549, 4294901760
    %1551 = vmatpush.msra.mxu0 %v1550
    %v1552 = vand.u32 %v601, 4294901760
    %v1553 = vsub.f32 %v601, %v1552
    %v1554 = vand.u32 %v1553, 4294901760
    %1555 = vmatpush.msra.mxu0 %v1554
    %v1556 = vand.u32 %v597, 4294901760
    %v1557 = vsub.f32 %v597, %v1556
    %v1558 = vand.u32 %v1557, 4294901760
    %1559 = vmatpush.msra.mxu0 %v1558
    %v1560 = vand.u32 %v593, 4294901760
    %v1561 = vsub.f32 %v593, %v1560
    %v1562 = vand.u32 %v1561, 4294901760
    %1563 = vmatpush.msra.mxu0 %v1562
    %v1564 = vand.u32 %v589, 4294901760
    %v1565 = vsub.f32 %v589, %v1564
    %v1566 = vand.u32 %v1565, 4294901760
    %1567 = vmatpush.msra.mxu0 %v1566
    %v1568 = vand.u32 %v585, 4294901760
    %v1569 = vsub.f32 %v585, %v1568
    %v1570 = vand.u32 %v1569, 4294901760
    %1571 = vmatpush.msra.mxu0 %v1570
    %v1572 = vand.u32 %v581, 4294901760
    %v1573 = vsub.f32 %v581, %v1572
    %v1574 = vand.u32 %v1573, 4294901760
    %1575 = vmatpush.msra.mxu0 %v1574
    %v1576 = vand.u32 %v577, 4294901760
    %v1577 = vsub.f32 %v577, %v1576
    %v1578 = vand.u32 %v1577, 4294901760
    %1579 = vmatpush.msra.mxu0 %v1578
    %v1580 = vand.u32 %v573, 4294901760
    %v1581 = vsub.f32 %v573, %v1580
    %v1582 = vand.u32 %v1581, 4294901760
    %1583 = vmatpush.msra.mxu0 %v1582
    %v1584 = vand.u32 %v569, 4294901760
    %v1585 = vsub.f32 %v569, %v1584
    %v1586 = vand.u32 %v1585, 4294901760
    %1587 = vmatpush.msra.mxu0 %v1586
    %v1588 = vand.u32 %v565, 4294901760
    %v1589 = vsub.f32 %v565, %v1588
    %v1590 = vand.u32 %v1589, 4294901760
    %1591 = vmatpush.msra.mxu0 %v1590
    %v1592 = vand.u32 %v561, 4294901760
    %v1593 = vsub.f32 %v561, %v1592
    %v1594 = vand.u32 %v1593, 4294901760
    %1595 = vmatpush.msra.mxu0 %v1594
    %v1596 = vand.u32 %v557, 4294901760
    %v1597 = vsub.f32 %v557, %v1596
    %v1598 = vand.u32 %v1597, 4294901760
    %1599 = vmatpush.msra.mxu0 %v1598
    %v1600 = vand.u32 %v64, 4294901760
    %1601 = vmatmul.f32.gmra.mxu0 %v1600
    %v1602 = vpop.f32.mrf.mxu0
    %v1603 = vadd.f32 %v1534, %v1602
    %1604 = vdwg.mxu0
    %v1605 = vand.u32 %v617, 4294901760
    %1606 = vmatpush.msra.mxu0 %v1605
    %v1607 = vand.u32 %v613, 4294901760
    %1608 = vmatpush.msra.mxu0 %v1607
    %v1609 = vand.u32 %v609, 4294901760
    %1610 = vmatpush.msra.mxu0 %v1609
    %v1611 = vand.u32 %v605, 4294901760
    %1612 = vmatpush.msra.mxu0 %v1611
    %v1613 = vand.u32 %v601, 4294901760
    %1614 = vmatpush.msra.mxu0 %v1613
    %v1615 = vand.u32 %v597, 4294901760
    %1616 = vmatpush.msra.mxu0 %v1615
    %v1617 = vand.u32 %v593, 4294901760
    %1618 = vmatpush.msra.mxu0 %v1617
    %v1619 = vand.u32 %v589, 4294901760
    %1620 = vmatpush.msra.mxu0 %v1619
    %v1621 = vand.u32 %v585, 4294901760
    %1622 = vmatpush.msra.mxu0 %v1621
    %v1623 = vand.u32 %v581, 4294901760
    %1624 = vmatpush.msra.mxu0 %v1623
    %v1625 = vand.u32 %v577, 4294901760
    %1626 = vmatpush.msra.mxu0 %v1625
    %v1627 = vand.u32 %v573, 4294901760
    %1628 = vmatpush.msra.mxu0 %v1627
    %v1629 = vand.u32 %v569, 4294901760
    %1630 = vmatpush.msra.mxu0 %v1629
    %v1631 = vand.u32 %v565, 4294901760
    %1632 = vmatpush.msra.mxu0 %v1631
    %v1633 = vand.u32 %v561, 4294901760
    %1634 = vmatpush.msra.mxu0 %v1633
    %v1635 = vand.u32 %v557, 4294901760
    %1636 = vmatpush.msra.mxu0 %v1635
    %v1637 = vand.u32 %v64, 4294901760
    %1638 = vmatmul.f32.gmra.mxu0 %v1637
    %v1639 = vpop.f32.mrf.mxu0
    %v1640 = vadd.f32 %v1603, %v1639
    %1641 = vdwg.mxu0
    %v1642 = vand.u32 %v618, 4294901760
    %1643 = vmatpush.msra.mxu0 %v1642
    %v1644 = vand.u32 %v614, 4294901760
    %1645 = vmatpush.msra.mxu0 %v1644
    %v1646 = vand.u32 %v610, 4294901760
    %1647 = vmatpush.msra.mxu0 %v1646
    %v1648 = vand.u32 %v606, 4294901760
    %1649 = vmatpush.msra.mxu0 %v1648
    %v1650 = vand.u32 %v602, 4294901760
    %1651 = vmatpush.msra.mxu0 %v1650
    %v1652 = vand.u32 %v598, 4294901760
    %1653 = vmatpush.msra.mxu0 %v1652
    %v1654 = vand.u32 %v594, 4294901760
    %1655 = vmatpush.msra.mxu0 %v1654
    %v1656 = vand.u32 %v590, 4294901760
    %1657 = vmatpush.msra.mxu0 %v1656
    %v1658 = vand.u32 %v586, 4294901760
    %1659 = vmatpush.msra.mxu0 %v1658
    %v1660 = vand.u32 %v582, 4294901760
    %1661 = vmatpush.msra.mxu0 %v1660
    %v1662 = vand.u32 %v578, 4294901760
    %1663 = vmatpush.msra.mxu0 %v1662
    %v1664 = vand.u32 %v574, 4294901760
    %1665 = vmatpush.msra.mxu0 %v1664
    %v1666 = vand.u32 %v570, 4294901760
    %1667 = vmatpush.msra.mxu0 %v1666
    %v1668 = vand.u32 %v566, 4294901760
    %1669 = vmatpush.msra.mxu0 %v1668
    %v1670 = vand.u32 %v562, 4294901760
    %1671 = vmatpush.msra.mxu0 %v1670
    %v1672 = vand.u32 %v558, 4294901760
    %1673 = vmatpush.msra.mxu0 %v1672
    %v1674 = vand.u32 %v64, 4294901760
    %v1675 = vsub.f32 %v64, %v1674
    %v1676 = vand.u32 %v1675, 4294901760
    %v1677 = vsub.f32 %v1675, %v1676
    %v1678 = vand.u32 %v1677, 4294901760
    %1679 = vmatmul.f32.gmra.mxu0 %v1678
    %v1680 = vpop.f32.mrf.mxu0
    %v1681 = vadd.f32 0.0, %v1680
    %1682 = vdwg.mxu0
    %v1683 = vand.u32 %v618, 4294901760
    %v1684 = vsub.f32 %v618, %v1683
    %v1685 = vand.u32 %v1684, 4294901760
    %v1686 = vsub.f32 %v1684, %v1685
    %v1687 = vand.u32 %v1686, 4294901760
    %1688 = vmatpush.msra.mxu0 %v1687
    %v1689 = vand.u32 %v614, 4294901760
    %v1690 = vsub.f32 %v614, %v1689
    %v1691 = vand.u32 %v1690, 4294901760
    %v1692 = vsub.f32 %v1690, %v1691
    %v1693 = vand.u32 %v1692, 4294901760
    %1694 = vmatpush.msra.mxu0 %v1693
    %v1695 = vand.u32 %v610, 4294901760
    %v1696 = vsub.f32 %v610, %v1695
    %v1697 = vand.u32 %v1696, 4294901760
    %v1698 = vsub.f32 %v1696, %v1697
    %v1699 = vand.u32 %v1698, 4294901760
    %1700 = vmatpush.msra.mxu0 %v1699
    %v1701 = vand.u32 %v606, 4294901760
    %v1702 = vsub.f32 %v606, %v1701
    %v1703 = vand.u32 %v1702, 4294901760
    %v1704 = vsub.f32 %v1702, %v1703
    %v1705 = vand.u32 %v1704, 4294901760
    %1706 = vmatpush.msra.mxu0 %v1705
    %v1707 = vand.u32 %v602, 4294901760
    %v1708 = vsub.f32 %v602, %v1707
    %v1709 = vand.u32 %v1708, 4294901760
    %v1710 = vsub.f32 %v1708, %v1709
    %v1711 = vand.u32 %v1710, 4294901760
    %1712 = vmatpush.msra.mxu0 %v1711
    %v1713 = vand.u32 %v598, 4294901760
    %v1714 = vsub.f32 %v598, %v1713
    %v1715 = vand.u32 %v1714, 4294901760
    %v1716 = vsub.f32 %v1714, %v1715
    %v1717 = vand.u32 %v1716, 4294901760
    %1718 = vmatpush.msra.mxu0 %v1717
    %v1719 = vand.u32 %v594, 4294901760
    %v1720 = vsub.f32 %v594, %v1719
    %v1721 = vand.u32 %v1720, 4294901760
    %v1722 = vsub.f32 %v1720, %v1721
    %v1723 = vand.u32 %v1722, 4294901760
    %1724 = vmatpush.msra.mxu0 %v1723
    %v1725 = vand.u32 %v590, 4294901760
    %v1726 = vsub.f32 %v590, %v1725
    %v1727 = vand.u32 %v1726, 4294901760
    %v1728 = vsub.f32 %v1726, %v1727
    %v1729 = vand.u32 %v1728, 4294901760
    %1730 = vmatpush.msra.mxu0 %v1729
    %v1731 = vand.u32 %v586, 4294901760
    %v1732 = vsub.f32 %v586, %v1731
    %v1733 = vand.u32 %v1732, 4294901760
    %v1734 = vsub.f32 %v1732, %v1733
    %v1735 = vand.u32 %v1734, 4294901760
    %1736 = vmatpush.msra.mxu0 %v1735
    %v1737 = vand.u32 %v582, 4294901760
    %v1738 = vsub.f32 %v582, %v1737
    %v1739 = vand.u32 %v1738, 4294901760
    %v1740 = vsub.f32 %v1738, %v1739
    %v1741 = vand.u32 %v1740, 4294901760
    %1742 = vmatpush.msra.mxu0 %v1741
    %v1743 = vand.u32 %v578, 4294901760
    %v1744 = vsub.f32 %v578, %v1743
    %v1745 = vand.u32 %v1744, 4294901760
    %v1746 = vsub.f32 %v1744, %v1745
    %v1747 = vand.u32 %v1746, 4294901760
    %1748 = vmatpush.msra.mxu0 %v1747
    %v1749 = vand.u32 %v574, 4294901760
    %v1750 = vsub.f32 %v574, %v1749
    %v1751 = vand.u32 %v1750, 4294901760
    %v1752 = vsub.f32 %v1750, %v1751
    %v1753 = vand.u32 %v1752, 4294901760
    %1754 = vmatpush.msra.mxu0 %v1753
    %v1755 = vand.u32 %v570, 4294901760
    %v1756 = vsub.f32 %v570, %v1755
    %v1757 = vand.u32 %v1756, 4294901760
    %v1758 = vsub.f32 %v1756, %v1757
    %v1759 = vand.u32 %v1758, 4294901760
    %1760 = vmatpush.msra.mxu0 %v1759
    %v1761 = vand.u32 %v566, 4294901760
    %v1762 = vsub.f32 %v566, %v1761
    %v1763 = vand.u32 %v1762, 4294901760
    %v1764 = vsub.f32 %v1762, %v1763
    %v1765 = vand.u32 %v1764, 4294901760
    %1766 = vmatpush.msra.mxu0 %v1765
    %v1767 = vand.u32 %v562, 4294901760
    %v1768 = vsub.f32 %v562, %v1767
    %v1769 = vand.u32 %v1768, 4294901760
    %v1770 = vsub.f32 %v1768, %v1769
    %v1771 = vand.u32 %v1770, 4294901760
    %1772 = vmatpush.msra.mxu0 %v1771
    %v1773 = vand.u32 %v558, 4294901760
    %v1774 = vsub.f32 %v558, %v1773
    %v1775 = vand.u32 %v1774, 4294901760
    %v1776 = vsub.f32 %v1774, %v1775
    %v1777 = vand.u32 %v1776, 4294901760
    %1778 = vmatpush.msra.mxu0 %v1777
    %v1779 = vand.u32 %v64, 4294901760
    %1780 = vmatmul.f32.gmra.mxu0 %v1779
    %v1781 = vpop.f32.mrf.mxu0
    %v1782 = vadd.f32 %v1681, %v1781
    %1783 = vdwg.mxu0
    %v1784 = vand.u32 %v618, 4294901760
    %v1785 = vsub.f32 %v618, %v1784
    %1786 = vmatpush.msra.mxu0 %v1785
    %v1787 = vand.u32 %v614, 4294901760
    %v1788 = vsub.f32 %v614, %v1787
    %1789 = vmatpush.msra.mxu0 %v1788
    %v1790 = vand.u32 %v610, 4294901760
    %v1791 = vsub.f32 %v610, %v1790
    %1792 = vmatpush.msra.mxu0 %v1791
    %v1793 = vand.u32 %v606, 4294901760
    %v1794 = vsub.f32 %v606, %v1793
    %1795 = vmatpush.msra.mxu0 %v1794
    %v1796 = vand.u32 %v602, 4294901760
    %v1797 = vsub.f32 %v602, %v1796
    %1798 = vmatpush.msra.mxu0 %v1797
    %v1799 = vand.u32 %v598, 4294901760
    %v1800 = vsub.f32 %v598, %v1799
    %1801 = vmatpush.msra.mxu0 %v1800
    %v1802 = vand.u32 %v594, 4294901760
    %v1803 = vsub.f32 %v594, %v1802
    %1804 = vmatpush.msra.mxu0 %v1803
    %v1805 = vand.u32 %v590, 4294901760
    %v1806 = vsub.f32 %v590, %v1805
    %1807 = vmatpush.msra.mxu0 %v1806
    %v1808 = vand.u32 %v586, 4294901760
    %v1809 = vsub.f32 %v586, %v1808
    %1810 = vmatpush.msra.mxu0 %v1809
    %v1811 = vand.u32 %v582, 4294901760
    %v1812 = vsub.f32 %v582, %v1811
    %1813 = vmatpush.msra.mxu0 %v1812
    %v1814 = vand.u32 %v578, 4294901760
    %v1815 = vsub.f32 %v578, %v1814
    %1816 = vmatpush.msra.mxu0 %v1815
    %v1817 = vand.u32 %v574, 4294901760
    %v1818 = vsub.f32 %v574, %v1817
    %1819 = vmatpush.msra.mxu0 %v1818
    %v1820 = vand.u32 %v570, 4294901760
    %v1821 = vsub.f32 %v570, %v1820
    %1822 = vmatpush.msra.mxu0 %v1821
    %v1823 = vand.u32 %v566, 4294901760
    %v1824 = vsub.f32 %v566, %v1823
    %1825 = vmatpush.msra.mxu0 %v1824
    %v1826 = vand.u32 %v562, 4294901760
    %v1827 = vsub.f32 %v562, %v1826
    %1828 = vmatpush.msra.mxu0 %v1827
    %v1829 = vand.u32 %v558, 4294901760
    %v1830 = vsub.f32 %v558, %v1829
    %1831 = vmatpush.msra.mxu0 %v1830
    %v1832 = vand.u32 %v64, 4294901760
    %v1833 = vsub.f32 %v64, %v1832
    %1834 = vmatmul.f32.gmra.mxu0 %v1833
    %v1835 = vpop.f32.mrf.mxu0
    %v1836 = vadd.f32 %v1782, %v1835
    %1837 = vdwg.mxu0
    %v1838 = vand.u32 %v618, 4294901760
    %1839 = vmatpush.msra.mxu0 %v1838
    %v1840 = vand.u32 %v614, 4294901760
    %1841 = vmatpush.msra.mxu0 %v1840
    %v1842 = vand.u32 %v610, 4294901760
    %1843 = vmatpush.msra.mxu0 %v1842
    %v1844 = vand.u32 %v606, 4294901760
    %1845 = vmatpush.msra.mxu0 %v1844
    %v1846 = vand.u32 %v602, 4294901760
    %1847 = vmatpush.msra.mxu0 %v1846
    %v1848 = vand.u32 %v598, 4294901760
    %1849 = vmatpush.msra.mxu0 %v1848
    %v1850 = vand.u32 %v594, 4294901760
    %1851 = vmatpush.msra.mxu0 %v1850
    %v1852 = vand.u32 %v590, 4294901760
    %1853 = vmatpush.msra.mxu0 %v1852
    %v1854 = vand.u32 %v586, 4294901760
    %1855 = vmatpush.msra.mxu0 %v1854
    %v1856 = vand.u32 %v582, 4294901760
    %1857 = vmatpush.msra.mxu0 %v1856
    %v1858 = vand.u32 %v578, 4294901760
    %1859 = vmatpush.msra.mxu0 %v1858
    %v1860 = vand.u32 %v574, 4294901760
    %1861 = vmatpush.msra.mxu0 %v1860
    %v1862 = vand.u32 %v570, 4294901760
    %1863 = vmatpush.msra.mxu0 %v1862
    %v1864 = vand.u32 %v566, 4294901760
    %1865 = vmatpush.msra.mxu0 %v1864
    %v1866 = vand.u32 %v562, 4294901760
    %1867 = vmatpush.msra.mxu0 %v1866
    %v1868 = vand.u32 %v558, 4294901760
    %1869 = vmatpush.msra.mxu0 %v1868
    %v1870 = vand.u32 %v64, 4294901760
    %v1871 = vsub.f32 %v64, %v1870
    %v1872 = vand.u32 %v1871, 4294901760
    %1873 = vmatmul.f32.gmra.mxu0 %v1872
    %v1874 = vpop.f32.mrf.mxu0
    %v1875 = vadd.f32 %v1836, %v1874
    %1876 = vdwg.mxu0
    %v1877 = vand.u32 %v618, 4294901760
    %v1878 = vsub.f32 %v618, %v1877
    %v1879 = vand.u32 %v1878, 4294901760
    %1880 = vmatpush.msra.mxu0 %v1879
    %v1881 = vand.u32 %v614, 4294901760
    %v1882 = vsub.f32 %v614, %v1881
    %v1883 = vand.u32 %v1882, 4294901760
    %1884 = vmatpush.msra.mxu0 %v1883
    %v1885 = vand.u32 %v610, 4294901760
    %v1886 = vsub.f32 %v610, %v1885
    %v1887 = vand.u32 %v1886, 4294901760
    %1888 = vmatpush.msra.mxu0 %v1887
    %v1889 = vand.u32 %v606, 4294901760
    %v1890 = vsub.f32 %v606, %v1889
    %v1891 = vand.u32 %v1890, 4294901760
    %1892 = vmatpush.msra.mxu0 %v1891
    %v1893 = vand.u32 %v602, 4294901760
    %v1894 = vsub.f32 %v602, %v1893
    %v1895 = vand.u32 %v1894, 4294901760
    %1896 = vmatpush.msra.mxu0 %v1895
    %v1897 = vand.u32 %v598, 4294901760
    %v1898 = vsub.f32 %v598, %v1897
    %v1899 = vand.u32 %v1898, 4294901760
    %1900 = vmatpush.msra.mxu0 %v1899
    %v1901 = vand.u32 %v594, 4294901760
    %v1902 = vsub.f32 %v594, %v1901
    %v1903 = vand.u32 %v1902, 4294901760
    %1904 = vmatpush.msra.mxu0 %v1903
    %v1905 = vand.u32 %v590, 4294901760
    %v1906 = vsub.f32 %v590, %v1905
    %v1907 = vand.u32 %v1906, 4294901760
    %1908 = vmatpush.msra.mxu0 %v1907
    %v1909 = vand.u32 %v586, 4294901760
    %v1910 = vsub.f32 %v586, %v1909
    %v1911 = vand.u32 %v1910, 4294901760
    %1912 = vmatpush.msra.mxu0 %v1911
    %v1913 = vand.u32 %v582, 4294901760
    %v1914 = vsub.f32 %v582, %v1913
    %v1915 = vand.u32 %v1914, 4294901760
    %1916 = vmatpush.msra.mxu0 %v1915
    %v1917 = vand.u32 %v578, 4294901760
    %v1918 = vsub.f32 %v578, %v1917
    %v1919 = vand.u32 %v1918, 4294901760
    %1920 = vmatpush.msra.mxu0 %v1919
    %v1921 = vand.u32 %v574, 4294901760
    %v1922 = vsub.f32 %v574, %v1921
    %v1923 = vand.u32 %v1922, 4294901760
    %1924 = vmatpush.msra.mxu0 %v1923
    %v1925 = vand.u32 %v570, 4294901760
    %v1926 = vsub.f32 %v570, %v1925
    %v1927 = vand.u32 %v1926, 4294901760
    %1928 = vmatpush.msra.mxu0 %v1927
    %v1929 = vand.u32 %v566, 4294901760
    %v1930 = vsub.f32 %v566, %v1929
    %v1931 = vand.u32 %v1930, 4294901760
    %1932 = vmatpush.msra.mxu0 %v1931
    %v1933 = vand.u32 %v562, 4294901760
    %v1934 = vsub.f32 %v562, %v1933
    %v1935 = vand.u32 %v1934, 4294901760
    %1936 = vmatpush.msra.mxu0 %v1935
    %v1937 = vand.u32 %v558, 4294901760
    %v1938 = vsub.f32 %v558, %v1937
    %v1939 = vand.u32 %v1938, 4294901760
    %1940 = vmatpush.msra.mxu0 %v1939
    %v1941 = vand.u32 %v64, 4294901760
    %1942 = vmatmul.f32.gmra.mxu0 %v1941
    %v1943 = vpop.f32.mrf.mxu0
    %v1944 = vadd.f32 %v1875, %v1943
    %1945 = vdwg.mxu0
    %v1946 = vand.u32 %v618, 4294901760
    %1947 = vmatpush.msra.mxu0 %v1946
    %v1948 = vand.u32 %v614, 4294901760
    %1949 = vmatpush.msra.mxu0 %v1948
    %v1950 = vand.u32 %v610, 4294901760
    %1951 = vmatpush.msra.mxu0 %v1950
    %v1952 = vand.u32 %v606, 4294901760
    %1953 = vmatpush.msra.mxu0 %v1952
    %v1954 = vand.u32 %v602, 4294901760
    %1955 = vmatpush.msra.mxu0 %v1954
    %v1956 = vand.u32 %v598, 4294901760
    %1957 = vmatpush.msra.mxu0 %v1956
    %v1958 = vand.u32 %v594, 4294901760
    %1959 = vmatpush.msra.mxu0 %v1958
    %v1960 = vand.u32 %v590, 4294901760
    %1961 = vmatpush.msra.mxu0 %v1960
    %v1962 = vand.u32 %v586, 4294901760
    %1963 = vmatpush.msra.mxu0 %v1962
    %v1964 = vand.u32 %v582, 4294901760
    %1965 = vmatpush.msra.mxu0 %v1964
    %v1966 = vand.u32 %v578, 4294901760
    %1967 = vmatpush.msra.mxu0 %v1966
    %v1968 = vand.u32 %v574, 4294901760
    %1969 = vmatpush.msra.mxu0 %v1968
    %v1970 = vand.u32 %v570, 4294901760
    %1971 = vmatpush.msra.mxu0 %v1970
    %v1972 = vand.u32 %v566, 4294901760
    %1973 = vmatpush.msra.mxu0 %v1972
    %v1974 = vand.u32 %v562, 4294901760
    %1975 = vmatpush.msra.mxu0 %v1974
    %v1976 = vand.u32 %v558, 4294901760
    %1977 = vmatpush.msra.mxu0 %v1976
    %v1978 = vand.u32 %v64, 4294901760
    %1979 = vmatmul.f32.gmra.mxu0 %v1978
    %v1980 = vpop.f32.mrf.mxu0
    %v1981 = vadd.f32 %v1944, %v1980
    %1982 = vdwg.mxu0
    %v1983 = vmul.f32 %v241, %v958
    %v1984 = vmul.f32 %v242, %v1299
    %v1985 = vmul.f32 %v243, %v1640
    %v1986 = vmul.f32 %v244, %v1981
    %1987 = vst [vmem:[#allocation8] sm:$0xff] %v1983
    %1988 = vst [vmem:[#allocation8 + $0x8] sm:$0xff] %v1984
    %1989 = vst [vmem:[#allocation8 + $0x10] sm:$0xff] %v1985
    %1990 = vst [vmem:[#allocation8 + $0x18] sm:$0xff] %v1986
    // Predicated region
    $region26: #{tpu_custom_call.1} parent=1 // pred_check
      _
    $region27: #{tpu_custom_call.1} parent=1 // pred_check_branch
      %1992 = sbr.rel (0) target = $region29
    $region28: #{tpu_custom_call.1} parent=1 // pred_region
      %1994 = vsyncadd [#allocation4], 0
      %s1996 = sshll.u32 [#allocation8], 4
      %s1997 = int_to_ptr.vmem [resolvable:$true] %s1996
      %s1998 = sshll.u32 %s3, 4
      %s1999 = int_to_ptr.hbm [resolvable:$true] %s1998
      %2001 = dma.vmem_to_hbm [thread:$0]  %s1997, 512, %s1999, [#allocation4]
    $region29: #{tpu_custom_call.1} parent=1 // pred_fallthru
      _
    // Predicated region
    $region30: #{tpu_custom_call.1} parent=1 // pred_check
      _
    $region31: #{tpu_custom_call.1} parent=1 // pred_check_branch
      %2003 = sbr.rel (0) target = $region33
    $region32: #{tpu_custom_call.1} parent=1 // pred_region
      %2005 = dma.done [#allocation4], 512
    $region33: #{tpu_custom_call.1} parent=1 // pred_fallthru
      _
    %2006 = vsyncpa [#allocation3], 1
    %2007 = vsyncpa [#allocation6], 1
    %2008 = vsyncpa [#allocation4], 1

</llo_original>
